<compile_context>
chip_gen: v6e
topology: v6e:2x2x1
jax: 0.10.0
libtpu: 0.0.40
codegen_flags: <defaults>
</compile_context>

<pallas_src>
import functools

import jax
import jax.numpy as jnp
from jax.experimental import pallas as pl
from jax.experimental.pallas import tpu as pltpu


def _contrastive_kernel(er_ref, ect_ref, sqr_ref, sqc_ref, lr_ref, lc_ref,
                        out_ref, *, margin, block, nb):
    """One (block x block) tile of the pair-loss matrix, folded to (8, 128)."""
    i = pl.program_id(0)
    j = pl.program_id(1)
    nb_half = nb // 2
    even = (nb % 2 == 0) and nb > 1

    def pair_tile():
        # Canonical (M,K)x(K,N) MXU feed: row block (block, Dp) x transposed
        # column block (Dp, block) -> no in-kernel transposes, f32 accumulation.
        g = jnp.dot(er_ref[...], ect_ref[...],
                    preferred_element_type=jnp.float32)          # (block, block)
        dist = jnp.maximum(sqr_ref[...] + sqc_ref[...] - 2.0 * g, 0.0)
        neg = jnp.maximum(margin - jnp.sqrt(dist), 0.0)
        same = lr_ref[...] == lc_ref[...]
        # Padded rows/cols need no mask multiplies: their squared norms are huge
        # (hinge saturates to exactly 0) and their labels are unique (never
        # compare "same"), so every pair touching padding contributes 0.
        return jnp.where(same, dist, neg * neg)

    def fold(per_pair):
        # Lane-dense partial reduction: vreg-aligned static slices folded with
        # pure VALU adds down to one (8, 128) tile (no XLU cross-lane reduce).
        cols = per_pair[:, 0:128]
        for c in range(1, block // 128):
            cols = cols + per_pair[:, c * 128:(c + 1) * 128]
        rows = cols[0:8, :]
        for r in range(1, block // 8):
            rows = rows + cols[r * 8:(r + 1) * 8, :]
        return rows

    @pl.when(j == 0)
    def _diagonal_block():
        per_pair = pair_tile()
        # Exclude self pairs (the reference only sums i < j); this also kills the
        # huge pad-pad diagonal terms.  Only nb tiles pay this extra select.
        eye = (jax.lax.broadcasted_iota(jnp.int32, (block, block), 0)
               == jax.lax.broadcasted_iota(jnp.int32, (block, block), 1))
        per_pair = jnp.where(eye, 0.0, per_pair)
        # 0.5x block weight applied to the folded (8,128) value, not the full
        # tile; this write also initialises the resident output accumulator.
        out_ref[...] = 0.5 * fold(per_pair)

    if even:
        # Last column step of rows i >= nb/2 is a dummy (its block pair is owned
        # by the mirror row); skip compute -- its DMA was already skipped by the
        # index_map repeating the previous column block.
        off_active = jnp.logical_and(j > 0,
                                     jnp.logical_or(j < nb_half, i < nb_half))
    else:
        off_active = j > 0

    @pl.when(off_active)
    def _off_diagonal_block():
        out_ref[...] += fold(pair_tile())


def _vmem_capacity_bytes():
    try:
        return int(pltpu.get_tpu_info().vmem_capacity_bytes)
    except Exception:
        return 64 * 1024 * 1024        # conservative (v7x-sized) fallback


def make_online_contrastive_loss(margin, *, block=256, use_bf16_gram=False):
    """Returns callable(embeddings [N, D] float, labels [N] int) -> scalar f32.

    block: pair-tile edge, multiple of 128 (256 suits v6e/v7x; 128 fine on v5e).
    use_bf16_gram: cast the Gram/MXU operands to bf16 once in the wrapper
        (norms and accumulation stay f32).  ~2x less HBM/VMEM traffic and native
        MXU throughput, at a small precision cost in the distances; avoid for
        large-norm embeddings where cancellation dominates small distances.
    """
    assert block % 128 == 0, "block must be a multiple of 128"
    margin = float(margin)

    def loss_fn(embeddings, labels):
        n, d = embeddings.shape
        nb = (n + block - 1) // block
        n_pad = nb * block
        d_pad = ((d + 127) // 128) * 128          # lane-align the contraction dim
        ncols = nb // 2 + 1                       # round-robin triangular coverage
        nb_half = nb // 2
        even = (nb % 2 == 0) and nb > 1
        pad = n_pad - n

        emb32 = embeddings.astype(jnp.float32)
        sq = jnp.sum(emb32 * emb32, axis=1)       # row squared norms, f32, once

        # Padded rows: zero embedding, huge squared norm (hinge saturates -> 0
        # loss for every pair touching a pad) and a unique label strictly below
        # every real label (never a "positive" pair).
        # TODO(synk): int32 underflow if real labels sit near INT32_MIN.
        big = float(max(1e16, 4.0 * margin * margin))
        lab = labels.astype(jnp.int32)
        if pad:
            sq = jnp.concatenate([sq, jnp.full((pad,), big, jnp.float32)])
            pad_lab = jnp.min(lab) - 1 - jnp.arange(pad, dtype=jnp.int32)
            lab = jnp.concatenate([lab, pad_lab])

        emb = jnp.pad(emb32, ((0, pad), (0, d_pad - d)))
        if use_bf16_gram:
            emb = emb.astype(jnp.bfloat16)        # cast once, in the wrapper
        emb_t = emb.T                             # (d_pad, n_pad): canonical RHS

        sq_row, sq_col = sq.reshape(n_pad, 1), sq.reshape(1, n_pad)
        lab_row, lab_col = lab.reshape(n_pad, 1), lab.reshape(1, n_pad)

        def col_block(i, j):
            # Column block for step (i, j): (i + j) mod nb.  Covers every
            # unordered block pair exactly once with ncols steps per row
            # (balanced across the "parallel" row axis).  For even nb the last
            # step of rows i >= nb/2 repeats the previous column block so the
            # skipped step issues no fresh DMA.
            if even:
                j = jnp.where(jnp.logical_and(j == nb_half, i >= nb_half),
                              j - 1, j)
            c = i + j
            return jnp.where(c >= nb, c - nb, c)

        kernel = functools.partial(_contrastive_kernel, margin=margin,
                                   block=block, nb=nb)

        ebytes = 2 if use_bf16_gram else 4
        t_act = nb * (nb + 1) // 2                # active upper-triangle tiles
        cost = pl.CostEstimate(
            flops=(2 * block * block * d_pad + 10 * block * block) * t_act,
            transcendentals=block * block * t_act,
            bytes_accessed=((t_act + nb) * block * d_pad * ebytes
                            + (t_act + nb) * 2 * block * 4
                            + nb * 8 * 128 * 4),
        )

        # VMEM budget: double-buffered operand streams + in-flight (block,block)
        # f32 temporaries + lane-padded (block,1) side blocks, capped by the
        # chip's capacity (only 64 MiB on v7x).
        # TODO(synk): chunk d_pad with a third "arbitrary" grid axis (and/or
        # pl.Buffered(3) on the streamed column spec) when block * d_pad no
        # longer fits comfortably.
        need = (4 * block * d_pad * ebytes
                + 8 * block * block * 4
                + 8 * block * 128 * 4
                + (2 << 20))
        vmem_limit = int(min(max(need, 32 * 1024 * 1024),
                             int(0.75 * _vmem_capacity_bytes())))

        partial_sums = pl.pallas_call(
            kernel,
            out_shape=jax.ShapeDtypeStruct((nb * 8, 128), jnp.float32),
            grid_spec=pltpu.PrefetchScalarGridSpec(
                num_scalar_prefetch=0,
                grid=(nb, ncols),
                in_specs=[
                    # Row embedding block: resident across the inner j loop.
                    pl.BlockSpec((block, d_pad), lambda i, j: (i, 0)),
                    # Transposed column embedding block: streamed round-robin.
                    pl.BlockSpec((d_pad, block),
                                 lambda i, j: (0, col_block(i, j))),
                    pl.BlockSpec((block, 1), lambda i, j: (i, 0)),     # sq row
                    pl.BlockSpec((1, block),
                                 lambda i, j: (0, col_block(i, j))),   # sq col
                    pl.BlockSpec((block, 1), lambda i, j: (i, 0)),     # label row
                    pl.BlockSpec((1, block),
                                 lambda i, j: (0, col_block(i, j))),   # label col
                ],
                out_specs=pl.BlockSpec((8, 128), lambda i, j: (i, 0)),
            ),
            compiler_params=pltpu.CompilerParams(
                dimension_semantics=("parallel", "arbitrary"),
                vmem_limit_bytes=vmem_limit,
            ),
            cost_estimate=cost,
        )(emb, emb_t, sq_row, sq_col, lab_row, lab_col)

        denom = jnp.float32(max(n * (n - 1) // 2, 1))   # guard n <= 1
        return jnp.sum(partial_sums) / denom

    return loss_fn


def reference_loss(embeddings, labels, margin):
    """Pure-JAX reference mirroring the PyTorch forward with AllPairsSelector."""
    n = embeddings.shape[0]
    diff = embeddings[:, None, :] - embeddings[None, :, :]
    dist = jnp.sum(diff * diff, axis=-1)
    same = labels[:, None] == labels[None, :]
    iu, ju = jnp.triu_indices(n, k=1)
    d = dist[iu, ju]
    s = same[iu, ju]
    pos = d
    neg = jnp.maximum(margin - jnp.sqrt(jnp.maximum(d, 0.0)), 0.0) ** 2
    return jnp.mean(jnp.where(s, pos, neg))


if __name__ == "__main__":
    key = jax.random.PRNGKey(0)
    k_emb, k_lab = jax.random.split(key)

    # N not a multiple of the tile -> exercises padding (BIG-norm / unique-label
    # encoding), the round-robin column coverage, the diagonal 0.5x path and the
    # even-nb dummy step.
    N, D = 200, 64
    margin = 1.0

    embeddings = 0.1 * jax.random.normal(k_emb, (N, D), dtype=jnp.float32)
    labels = jax.random.randint(k_lab, (N,), 0, 4, dtype=jnp.int32)

    ref = jax.block_until_ready(reference_loss(embeddings, labels, margin))

    # f32 Gram path, two tile sizes (multi-block grid and single-block grid).
    for blk in (128, 256):
        loss_fn = make_online_contrastive_loss(margin, block=blk)
        loss = jax.block_until_ready(loss_fn(embeddings, labels))
        assert jnp.allclose(loss, ref, rtol=1e-4, atol=1e-4), (blk, loss, ref)

    # bf16 Gram path (operands cast once in the wrapper; looser tolerance).
    loss_bf16 = jax.block_until_ready(
        make_online_contrastive_loss(margin, block=128, use_bf16_gram=True)(
            embeddings, labels))
    assert jnp.allclose(loss_bf16, ref, rtol=5e-2, atol=1e-2), (loss_bf16, ref)

    print("KERNEL_OK")
</pallas_src>

<mosaic_0001>
module attributes {stable_mosaic.version = 11 : i64} {
  func.func @_contrastive_kernel(%arg0: i32, %arg1: i32, %arg2: memref<128x128xf32, #tpu.memory_space<vmem>>, %arg3: memref<128x128xf32, #tpu.memory_space<vmem>>, %arg4: memref<128x1xf32, #tpu.memory_space<vmem>>, %arg5: memref<1x128xf32, #tpu.memory_space<vmem>>, %arg6: memref<128x1xi32, #tpu.memory_space<vmem>>, %arg7: memref<1x128xi32, #tpu.memory_space<vmem>>, %arg8: memref<8x128xf32, #tpu.memory_space<vmem>>) attributes {dimension_semantics = [#tpu.dimension_semantics<parallel>, #tpu.dimension_semantics<arbitrary>], iteration_bounds = array<i64: 2, 2>, scalar_prefetch = 0 : i64, scratch_operands = 0 : i64, tpu.core_type = #tpu.core_type<tc>, window_params = [{transform_indices = @transform_0, window_bounds = array<i64: 128, 128>}, {transform_indices = @transform_1, window_bounds = array<i64: 128, 128>}, {transform_indices = @transform_2, window_bounds = array<i64: 128, 1>}, {transform_indices = @transform_3, window_bounds = array<i64: 1, 128>}, {transform_indices = @transform_4, window_bounds = array<i64: 128, 1>}, {transform_indices = @transform_5, window_bounds = array<i64: 1, 128>}, {transform_indices = @transform_6, window_bounds = array<i64: 8, 128>}]} {
    %c0_i32 = arith.constant 0 : i32
    %0 = arith.cmpi eq, %arg1, %c0_i32 : i32
    %1 = arith.extui %0 : i1 to i32
    %c0_i32_0 = arith.constant 0 : i32
    %2 = arith.cmpi ne, %1, %c0_i32_0 : i32
    scf.if %2 {
      %c0 = arith.constant 0 : index
      %c0_4 = arith.constant 0 : index
      %10 = vector.load %arg2[%c0, %c0_4] : memref<128x128xf32, #tpu.memory_space<vmem>>, vector<128x128xf32>
      %c0_5 = arith.constant 0 : index
      %c0_6 = arith.constant 0 : index
      %11 = vector.load %arg3[%c0_5, %c0_6] : memref<128x128xf32, #tpu.memory_space<vmem>>, vector<128x128xf32>
      %cst = arith.constant dense<0.000000e+00> : vector<128x128xf32>
      %12 = tpu.matmul %10, %11, %cst {dimension_numbers = #tpu.dot_dimension_numbers<[1], [0], [0], [1], [0, 0, 1, 1], [], []>} : vector<128x128xf32>, vector<128x128xf32>, vector<128x128xf32> -> vector<128x128xf32>
      %c0_7 = arith.constant 0 : index
      %c0_8 = arith.constant 0 : index
      %13 = vector.load %arg4[%c0_7, %c0_8] : memref<128x1xf32, #tpu.memory_space<vmem>>, vector<128x1xf32>
      %c0_9 = arith.constant 0 : index
      %c0_10 = arith.constant 0 : index
      %14 = vector.load %arg5[%c0_9, %c0_10] : memref<1x128xf32, #tpu.memory_space<vmem>>, vector<1x128xf32>
      %15 = vector.broadcast %13 : vector<128x1xf32> to vector<128x128xf32>
      %16 = vector.broadcast %14 : vector<1x128xf32> to vector<128x128xf32>
      %17 = arith.addf %15, %16 : vector<128x128xf32>
      %cst_11 = arith.constant 2.000000e+00 : f32
      %18 = vector.broadcast %cst_11 : f32 to vector<128x128xf32>
      %19 = arith.mulf %18, %12 : vector<128x128xf32>
      %20 = arith.subf %17, %19 : vector<128x128xf32>
      %cst_12 = arith.constant 0.000000e+00 : f32
      %21 = vector.broadcast %cst_12 : f32 to vector<128x128xf32>
      %22 = arith.maximumf %20, %21 : vector<128x128xf32>
      %23 = math.sqrt %22 : vector<128x128xf32>
      %cst_13 = arith.constant 1.000000e+00 : f32
      %24 = vector.broadcast %cst_13 : f32 to vector<128x128xf32>
      %25 = arith.subf %24, %23 : vector<128x128xf32>
      %cst_14 = arith.constant 0.000000e+00 : f32
      %26 = vector.broadcast %cst_14 : f32 to vector<128x128xf32>
      %27 = arith.maximumf %25, %26 : vector<128x128xf32>
      %c0_15 = arith.constant 0 : index
      %c0_16 = arith.constant 0 : index
      %28 = vector.load %arg6[%c0_15, %c0_16] : memref<128x1xi32, #tpu.memory_space<vmem>>, vector<128x1xi32>
      %c0_17 = arith.constant 0 : index
      %c0_18 = arith.constant 0 : index
      %29 = vector.load %arg7[%c0_17, %c0_18] : memref<1x128xi32, #tpu.memory_space<vmem>>, vector<1x128xi32>
      %30 = vector.broadcast %28 : vector<128x1xi32> to vector<128x128xi32>
      %31 = vector.broadcast %29 : vector<1x128xi32> to vector<128x128xi32>
      %32 = arith.cmpi eq, %30, %31 : vector<128x128xi32>
      %33 = arith.mulf %27, %27 : vector<128x128xf32>
      %34 = arith.select %32, %22, %33 : vector<128x128xi1>, vector<128x128xf32>
      %35 = tpu.iota {dimensions = array<i32: 0>} : vector<128x128xi32>
      %36 = tpu.iota {dimensions = array<i32: 1>} : vector<128x128xi32>
      %37 = arith.cmpi eq, %35, %36 : vector<128x128xi32>
      %cst_19 = arith.constant 0.000000e+00 : f32
      %38 = vector.broadcast %cst_19 : f32 to vector<128x128xf32>
      %39 = arith.select %37, %38, %34 : vector<128x128xi1>, vector<128x128xf32>
      %40 = vector.extract_strided_slice %39 {offsets = [0, 0], sizes = [8, 128], strides = [1, 1]} : vector<128x128xf32> to vector<8x128xf32>
      %41 = vector.extract_strided_slice %39 {offsets = [8, 0], sizes = [8, 128], strides = [1, 1]} : vector<128x128xf32> to vector<8x128xf32>
      %42 = arith.addf %40, %41 : vector<8x128xf32>
      %43 = vector.extract_strided_slice %39 {offsets = [16, 0], sizes = [8, 128], strides = [1, 1]} : vector<128x128xf32> to vector<8x128xf32>
      %44 = arith.addf %42, %43 : vector<8x128xf32>
      %45 = vector.extract_strided_slice %39 {offsets = [24, 0], sizes = [8, 128], strides = [1, 1]} : vector<128x128xf32> to vector<8x128xf32>
      %46 = arith.addf %44, %45 : vector<8x128xf32>
      %47 = vector.extract_strided_slice %39 {offsets = [32, 0], sizes = [8, 128], strides = [1, 1]} : vector<128x128xf32> to vector<8x128xf32>
      %48 = arith.addf %46, %47 : vector<8x128xf32>
      %49 = vector.extract_strided_slice %39 {offsets = [40, 0], sizes = [8, 128], strides = [1, 1]} : vector<128x128xf32> to vector<8x128xf32>
      %50 = arith.addf %48, %49 : vector<8x128xf32>
      %51 = vector.extract_strided_slice %39 {offsets = [48, 0], sizes = [8, 128], strides = [1, 1]} : vector<128x128xf32> to vector<8x128xf32>
      %52 = arith.addf %50, %51 : vector<8x128xf32>
      %53 = vector.extract_strided_slice %39 {offsets = [56, 0], sizes = [8, 128], strides = [1, 1]} : vector<128x128xf32> to vector<8x128xf32>
      %54 = arith.addf %52, %53 : vector<8x128xf32>
      %55 = vector.extract_strided_slice %39 {offsets = [64, 0], sizes = [8, 128], strides = [1, 1]} : vector<128x128xf32> to vector<8x128xf32>
      %56 = arith.addf %54, %55 : vector<8x128xf32>
      %57 = vector.extract_strided_slice %39 {offsets = [72, 0], sizes = [8, 128], strides = [1, 1]} : vector<128x128xf32> to vector<8x128xf32>
      %58 = arith.addf %56, %57 : vector<8x128xf32>
      %59 = vector.extract_strided_slice %39 {offsets = [80, 0], sizes = [8, 128], strides = [1, 1]} : vector<128x128xf32> to vector<8x128xf32>
      %60 = arith.addf %58, %59 : vector<8x128xf32>
      %61 = vector.extract_strided_slice %39 {offsets = [88, 0], sizes = [8, 128], strides = [1, 1]} : vector<128x128xf32> to vector<8x128xf32>
      %62 = arith.addf %60, %61 : vector<8x128xf32>
      %63 = vector.extract_strided_slice %39 {offsets = [96, 0], sizes = [8, 128], strides = [1, 1]} : vector<128x128xf32> to vector<8x128xf32>
      %64 = arith.addf %62, %63 : vector<8x128xf32>
      %65 = vector.extract_strided_slice %39 {offsets = [104, 0], sizes = [8, 128], strides = [1, 1]} : vector<128x128xf32> to vector<8x128xf32>
      %66 = arith.addf %64, %65 : vector<8x128xf32>
      %67 = vector.extract_strided_slice %39 {offsets = [112, 0], sizes = [8, 128], strides = [1, 1]} : vector<128x128xf32> to vector<8x128xf32>
      %68 = arith.addf %66, %67 : vector<8x128xf32>
      %69 = vector.extract_strided_slice %39 {offsets = [120, 0], sizes = [8, 128], strides = [1, 1]} : vector<128x128xf32> to vector<8x128xf32>
      %70 = arith.addf %68, %69 : vector<8x128xf32>
      %cst_20 = arith.constant 5.000000e-01 : f32
      %71 = vector.broadcast %cst_20 : f32 to vector<8x128xf32>
      %72 = arith.mulf %71, %70 : vector<8x128xf32>
      %c0_21 = arith.constant 0 : index
      %c0_22 = arith.constant 0 : index
      %73 = vector.load %arg8[%c0_21, %c0_22] : memref<8x128xf32, #tpu.memory_space<vmem>>, vector<8x128xf32>
      tpu.vector_store %arg8[%c0_21, %c0_22], %72 {strides = array<i32>} : memref<8x128xf32, #tpu.memory_space<vmem>>, vector<8x128xf32>,
    } else {
    }
    %c0_i32_1 = arith.constant 0 : i32
    %3 = arith.cmpi sgt, %arg1, %c0_i32_1 : i32
    %c1_i32 = arith.constant 1 : i32
    %4 = arith.cmpi slt, %arg1, %c1_i32 : i32
    %c1_i32_2 = arith.constant 1 : i32
    %5 = arith.cmpi slt, %arg0, %c1_i32_2 : i32
    %6 = arith.ori %4, %5 : i1
    %7 = arith.andi %3, %6 : i1
    %8 = arith.extui %7 : i1 to i32
    %c0_i32_3 = arith.constant 0 : i32
    %9 = arith.cmpi ne, %8, %c0_i32_3 : i32
    scf.if %9 {
      %c0 = arith.constant 0 : index
      %c0_4 = arith.constant 0 : index
      %10 = vector.load %arg8[%c0, %c0_4] : memref<8x128xf32, #tpu.memory_space<vmem>>, vector<8x128xf32>
      %c0_5 = arith.constant 0 : index
      %c0_6 = arith.constant 0 : index
      %11 = vector.load %arg2[%c0_5, %c0_6] : memref<128x128xf32, #tpu.memory_space<vmem>>, vector<128x128xf32>
      %c0_7 = arith.constant 0 : index
      %c0_8 = arith.constant 0 : index
      %12 = vector.load %arg3[%c0_7, %c0_8] : memref<128x128xf32, #tpu.memory_space<vmem>>, vector<128x128xf32>
      %cst = arith.constant dense<0.000000e+00> : vector<128x128xf32>
      %13 = tpu.matmul %11, %12, %cst {dimension_numbers = #tpu.dot_dimension_numbers<[1], [0], [0], [1], [0, 0, 1, 1], [], []>} : vector<128x128xf32>, vector<128x128xf32>, vector<128x128xf32> -> vector<128x128xf32>
      %c0_9 = arith.constant 0 : index
      %c0_10 = arith.constant 0 : index
      %14 = vector.load %arg4[%c0_9, %c0_10] : memref<128x1xf32, #tpu.memory_space<vmem>>, vector<128x1xf32>
      %c0_11 = arith.constant 0 : index
      %c0_12 = arith.constant 0 : index
      %15 = vector.load %arg5[%c0_11, %c0_12] : memref<1x128xf32, #tpu.memory_space<vmem>>, vector<1x128xf32>
      %16 = vector.broadcast %14 : vector<128x1xf32> to vector<128x128xf32>
      %17 = vector.broadcast %15 : vector<1x128xf32> to vector<128x128xf32>
      %18 = arith.addf %16, %17 : vector<128x128xf32>
      %cst_13 = arith.constant 2.000000e+00 : f32
      %19 = vector.broadcast %cst_13 : f32 to vector<128x128xf32>
      %20 = arith.mulf %19, %13 : vector<128x128xf32>
      %21 = arith.subf %18, %20 : vector<128x128xf32>
      %cst_14 = arith.constant 0.000000e+00 : f32
      %22 = vector.broadcast %cst_14 : f32 to vector<128x128xf32>
      %23 = arith.maximumf %21, %22 : vector<128x128xf32>
      %24 = math.sqrt %23 : vector<128x128xf32>
      %cst_15 = arith.constant 1.000000e+00 : f32
      %25 = vector.broadcast %cst_15 : f32 to vector<128x128xf32>
      %26 = arith.subf %25, %24 : vector<128x128xf32>
      %cst_16 = arith.constant 0.000000e+00 : f32
      %27 = vector.broadcast %cst_16 : f32 to vector<128x128xf32>
      %28 = arith.maximumf %26, %27 : vector<128x128xf32>
      %c0_17 = arith.constant 0 : index
      %c0_18 = arith.constant 0 : index
      %29 = vector.load %arg6[%c0_17, %c0_18] : memref<128x1xi32, #tpu.memory_space<vmem>>, vector<128x1xi32>
      %c0_19 = arith.constant 0 : index
      %c0_20 = arith.constant 0 : index
      %30 = vector.load %arg7[%c0_19, %c0_20] : memref<1x128xi32, #tpu.memory_space<vmem>>, vector<1x128xi32>
      %31 = vector.broadcast %29 : vector<128x1xi32> to vector<128x128xi32>
      %32 = vector.broadcast %30 : vector<1x128xi32> to vector<128x128xi32>
      %33 = arith.cmpi eq, %31, %32 : vector<128x128xi32>
      %34 = arith.mulf %28, %28 : vector<128x128xf32>
      %35 = arith.select %33, %23, %34 : vector<128x128xi1>, vector<128x128xf32>
      %36 = vector.extract_strided_slice %35 {offsets = [0, 0], sizes = [8, 128], strides = [1, 1]} : vector<128x128xf32> to vector<8x128xf32>
      %37 = vector.extract_strided_slice %35 {offsets = [8, 0], sizes = [8, 128], strides = [1, 1]} : vector<128x128xf32> to vector<8x128xf32>
      %38 = arith.addf %36, %37 : vector<8x128xf32>
      %39 = vector.extract_strided_slice %35 {offsets = [16, 0], sizes = [8, 128], strides = [1, 1]} : vector<128x128xf32> to vector<8x128xf32>
      %40 = arith.addf %38, %39 : vector<8x128xf32>
      %41 = vector.extract_strided_slice %35 {offsets = [24, 0], sizes = [8, 128], strides = [1, 1]} : vector<128x128xf32> to vector<8x128xf32>
      %42 = arith.addf %40, %41 : vector<8x128xf32>
      %43 = vector.extract_strided_slice %35 {offsets = [32, 0], sizes = [8, 128], strides = [1, 1]} : vector<128x128xf32> to vector<8x128xf32>
      %44 = arith.addf %42, %43 : vector<8x128xf32>
      %45 = vector.extract_strided_slice %35 {offsets = [40, 0], sizes = [8, 128], strides = [1, 1]} : vector<128x128xf32> to vector<8x128xf32>
      %46 = arith.addf %44, %45 : vector<8x128xf32>
      %47 = vector.extract_strided_slice %35 {offsets = [48, 0], sizes = [8, 128], strides = [1, 1]} : vector<128x128xf32> to vector<8x128xf32>
      %48 = arith.addf %46, %47 : vector<8x128xf32>
      %49 = vector.extract_strided_slice %35 {offsets = [56, 0], sizes = [8, 128], strides = [1, 1]} : vector<128x128xf32> to vector<8x128xf32>
      %50 = arith.addf %48, %49 : vector<8x128xf32>
      %51 = vector.extract_strided_slice %35 {offsets = [64, 0], sizes = [8, 128], strides = [1, 1]} : vector<128x128xf32> to vector<8x128xf32>
      %52 = arith.addf %50, %51 : vector<8x128xf32>
      %53 = vector.extract_strided_slice %35 {offsets = [72, 0], sizes = [8, 128], strides = [1, 1]} : vector<128x128xf32> to vector<8x128xf32>
      %54 = arith.addf %52, %53 : vector<8x128xf32>
      %55 = vector.extract_strided_slice %35 {offsets = [80, 0], sizes = [8, 128], strides = [1, 1]} : vector<128x128xf32> to vector<8x128xf32>
      %56 = arith.addf %54, %55 : vector<8x128xf32>
      %57 = vector.extract_strided_slice %35 {offsets = [88, 0], sizes = [8, 128], strides = [1, 1]} : vector<128x128xf32> to vector<8x128xf32>
      %58 = arith.addf %56, %57 : vector<8x128xf32>
      %59 = vector.extract_strided_slice %35 {offsets = [96, 0], sizes = [8, 128], strides = [1, 1]} : vector<128x128xf32> to vector<8x128xf32>
      %60 = arith.addf %58, %59 : vector<8x128xf32>
      %61 = vector.extract_strided_slice %35 {offsets = [104, 0], sizes = [8, 128], strides = [1, 1]} : vector<128x128xf32> to vector<8x128xf32>
      %62 = arith.addf %60, %61 : vector<8x128xf32>
      %63 = vector.extract_strided_slice %35 {offsets = [112, 0], sizes = [8, 128], strides = [1, 1]} : vector<128x128xf32> to vector<8x128xf32>
      %64 = arith.addf %62, %63 : vector<8x128xf32>
      %65 = vector.extract_strided_slice %35 {offsets = [120, 0], sizes = [8, 128], strides = [1, 1]} : vector<128x128xf32> to vector<8x128xf32>
      %66 = arith.addf %64, %65 : vector<8x128xf32>
      %67 = arith.addf %10, %66 : vector<8x128xf32>
      %c0_21 = arith.constant 0 : index
      %c0_22 = arith.constant 0 : index
      %68 = vector.load %arg8[%c0_21, %c0_22] : memref<8x128xf32, #tpu.memory_space<vmem>>, vector<8x128xf32>
      tpu.vector_store %arg8[%c0_21, %c0_22], %67 {strides = array<i32>} : memref<8x128xf32, #tpu.memory_space<vmem>>, vector<8x128xf32>,
    } else {
    }
    return
  }
  func.func @transform_0(%arg0: i32, %arg1: i32) -> (i32, i32) {
    %c0_i32 = arith.constant 0 : i32
    %c0_i32_0 = arith.constant 0 : i32
    return %arg0, %c0_i32 : i32, i32
  }
  func.func @transform_1(%arg0: i32, %arg1: i32) -> (i32, i32) {
    %c1_i32 = arith.constant 1 : i32
    %0 = arith.cmpi eq, %arg1, %c1_i32 : i32
    %c1_i32_0 = arith.constant 1 : i32
    %1 = arith.cmpi sge, %arg0, %c1_i32_0 : i32
    %2 = arith.andi %0, %1 : i1
    %c1_i32_1 = arith.constant 1 : i32
    %3 = arith.subi %arg1, %c1_i32_1 : i32
    %4 = arith.select %2, %3, %arg1 : i32
    %5 = arith.addi %arg0, %4 : i32
    %c2_i32 = arith.constant 2 : i32
    %6 = arith.cmpi sge, %5, %c2_i32 : i32
    %c2_i32_2 = arith.constant 2 : i32
    %7 = arith.subi %5, %c2_i32_2 : i32
    %8 = arith.select %6, %7, %5 : i32
    %c0_i32 = arith.constant 0 : i32
    %c0_i32_3 = arith.constant 0 : i32
    return %c0_i32, %8 : i32, i32
  }
  func.func @transform_2(%arg0: i32, %arg1: i32) -> (i32, i32) {
    %c0_i32 = arith.constant 0 : i32
    %c0_i32_0 = arith.constant 0 : i32
    return %arg0, %c0_i32 : i32, i32
  }
  func.func @transform_3(%arg0: i32, %arg1: i32) -> (i32, i32) {
    %c1_i32 = arith.constant 1 : i32
    %0 = arith.cmpi eq, %arg1, %c1_i32 : i32
    %c1_i32_0 = arith.constant 1 : i32
    %1 = arith.cmpi sge, %arg0, %c1_i32_0 : i32
    %2 = arith.andi %0, %1 : i1
    %c1_i32_1 = arith.constant 1 : i32
    %3 = arith.subi %arg1, %c1_i32_1 : i32
    %4 = arith.select %2, %3, %arg1 : i32
    %5 = arith.addi %arg0, %4 : i32
    %c2_i32 = arith.constant 2 : i32
    %6 = arith.cmpi sge, %5, %c2_i32 : i32
    %c2_i32_2 = arith.constant 2 : i32
    %7 = arith.subi %5, %c2_i32_2 : i32
    %8 = arith.select %6, %7, %5 : i32
    %c0_i32 = arith.constant 0 : i32
    %c0_i32_3 = arith.constant 0 : i32
    return %c0_i32, %8 : i32, i32
  }
  func.func @transform_4(%arg0: i32, %arg1: i32) -> (i32, i32) {
    %c0_i32 = arith.constant 0 : i32
    %c0_i32_0 = arith.constant 0 : i32
    return %arg0, %c0_i32 : i32, i32
  }
  func.func @transform_5(%arg0: i32, %arg1: i32) -> (i32, i32) {
    %c1_i32 = arith.constant 1 : i32
    %0 = arith.cmpi eq, %arg1, %c1_i32 : i32
    %c1_i32_0 = arith.constant 1 : i32
    %1 = arith.cmpi sge, %arg0, %c1_i32_0 : i32
    %2 = arith.andi %0, %1 : i1
    %c1_i32_1 = arith.constant 1 : i32
    %3 = arith.subi %arg1, %c1_i32_1 : i32
    %4 = arith.select %2, %3, %arg1 : i32
    %5 = arith.addi %arg0, %4 : i32
    %c2_i32 = arith.constant 2 : i32
    %6 = arith.cmpi sge, %5, %c2_i32 : i32
    %c2_i32_2 = arith.constant 2 : i32
    %7 = arith.subi %5, %c2_i32_2 : i32
    %8 = arith.select %6, %7, %5 : i32
    %c0_i32 = arith.constant 0 : i32
    %c0_i32_3 = arith.constant 0 : i32
    return %c0_i32, %8 : i32, i32
  }
  func.func @transform_6(%arg0: i32, %arg1: i32) -> (i32, i32) {
    %c0_i32 = arith.constant 0 : i32
    %c0_i32_0 = arith.constant 0 : i32
    return %arg0, %c0_i32 : i32, i32
  }
}

</mosaic_0001>

<llo_original>
// kernel: tpu_custom_call.1
$region0: #{tpu_custom_call.1}
  #allocation0 [shape = 'u32[]', space=smem, size = 0x4, offset = 0x4, fixed_abs, tag = 'smem constant byte address 0x4 - core index']
  #allocation1 [shape = 'u32[144,128]{1,0:T(1,128)}', space=vmem, size = 0x12000, scoped, tag = 'internal scratch']
  %s0 = inlined_call_operand.vmem [shape: f32[256,128], index: 0, kind: input, shape index: {}]
  %s1 = inlined_call_operand.vmem [shape: f32[128,256], index: 1, kind: input, shape index: {}]
  %s2 = inlined_call_operand.vmem [shape: f32[256,1], index: 2, kind: input, shape index: {}]
  %s3 = inlined_call_operand.vmem [shape: f32[1,256], index: 3, kind: input, shape index: {}]
  %s4 = inlined_call_operand.vmem [shape: s32[256,1], index: 4, kind: input, shape index: {}]
  %s5 = inlined_call_operand.vmem [shape: s32[1,256], index: 5, kind: input, shape index: {}]
  %s6 = inlined_call_operand.hbm [shape: f32[16,128], index: 6, kind: output, shape index: {}]
  %s7 = sld [smem:[#allocation0]]
  $region103: #{tpu_custom_call.1} parent=0
    _
  %s9 = ssub.s32 1, %s7
  %s10 = scalar_select 0, %s9, %s7
  $region1: #{tpu_custom_call.1} parent=0
    #allocation2 [shape = 'u8[131072]{0}', space=vmem, size = 0x20000, scoped, tag = 'input window, operand 1']
    #allocation3 [shape = 'u8[8192]{0}', space=vmem, size = 0x2000, scoped, tag = 'output window, operand 0']
    #allocation4 [shape = 's32[2]{0}', space=sflag, size = 0x8, scoped, tag = 'scoped memory for tpu_custom_call.1']
    %11 = vsyncpa [#allocation4], 0
    %s12 = scalar_lea.sflag [#allocation4], 1
    %13 = vsyncpa %s12, 0
    loop: start=0, step=1, limit=6
    $region2: #{tpu_custom_call.1} parent=1 // loop_pre_header
      _
    $region3: #{tpu_custom_call.1} parent=1 // loop_header
      %s15 = sphi 0, %s19
      %p16 = scmp.ge.s32.totalorder %s15, 6
      %s22 = sphi 0, %s34
      %s23 = sphi 0, %s30
      %s24 = sphi 0, %s22
      %s25 = sphi 0, %s23
      %s26 = sphi 0, %s24
      %s27 = sphi 0, %s25
      %s37 = sphi 0, %s39
      %s40 = sphi 0, %s37
      %s41 = sphi 0, %s40
      %s57 = sphi 0, %s41
      %s83 = sphi 0, %s85
      %s86 = sphi 0, %s83
      %s87 = sphi 0, %s86
      %s103 = sphi 0, %s87
      %s109 = sphi 0, %s111
      %s112 = sphi 0, %s109
      %s113 = sphi 0, %s112
      %s129 = sphi 0, %s113
      %s155 = sphi 0, %s157
      %s158 = sphi 0, %s155
      %s159 = sphi 0, %s158
      %s175 = sphi 0, %s159
      %s181 = sphi 0, %s183
      %s184 = sphi 0, %s181
      %s185 = sphi 0, %s184
      %s201 = sphi 0, %s185
      %s227 = sphi 0, %s229
      %s230 = sphi 0, %s227
      %s231 = sphi 0, %s230
      %s247 = sphi 0, %s231
      %s253 = sphi 0, %s255
      %s256 = sphi 0, %s253
      %s257 = sphi 0, %s256
      %s273 = sphi 0, %s257
    $region4: #{tpu_custom_call.1} parent=1 // loop_header_branch
      %18 = sbr.rel (%p16) target = $region8
    $region5: #{tpu_custom_call.1} parent=1 // loop_body
      %s20 = ssub.s32 %s15, 1
      %s21 = ssub.s32 %s15, 2
      %s28 = sadd.s32 1, %s23
      %p29 = scmp.ge.s32.totalorder %s28, 2
      %s30 = scalar_select %p29, 0, %s28
      %s31 = sadd.s32 1, %s22
      %s32 = scalar_select %p29, %s31, %s22
      %p33 = scmp.ge.s32.totalorder %s32, 2
      %s34 = scalar_select %p33, 0, %s32
      %s35 = ssub.s32 %s22, %s34
      %p36 = scmp.eq.s32.totalorder %s35, 0
      %s38 = sadd.s32 %s37, 1
      %s39 = scalar_select %p36, %s37, %s38
      %p42 = pneg %p36
      %p43 = scmp.eq.s32.totalorder %s15, 3
      %p44 = por %p42, %p43
      %p45 = scmp.ne.s32.totalorder %s37, %s40
      %p46 = scmp.eq.s32.totalorder %s15, 0
      %p47 = por %p45, %p46
      %p48 = scmp.ne.s32.totalorder %s37, %s40
      %p49 = scmp.eq.s32.totalorder %s20, 3
      %p50 = por %p48, %p49
      %p51 = scmp.ne.s32.totalorder %s40, %s41
      %p52 = scmp.eq.s32.totalorder %s20, 0
      %p53 = por %p51, %p52
      %p54 = scmp.ne.s32.totalorder %s40, %s41
      %p55 = scmp.eq.s32.totalorder %s21, 3
      %p56 = por %p54, %p55
      %p58 = scmp.ne.s32.totalorder %s41, %s57
      %p59 = scmp.eq.s32.totalorder %s21, 0
      %p60 = por %p58, %p59
      %p61 = scmp.eq.s32.totalorder %s23, 1
      %p62 = scmp.ge.s32.totalorder %s22, 1
      %p63 = pnand %p61, %p62
      %p64 = pneg %p63
      %s65 = ssub.s32 %s23, 1
      %s66 = scalar_select %p64, %s65, %s23
      %s67 = sadd.s32 %s22, %s66
      %p68 = scmp.ge.s32.totalorder %s67, 2
      %s69 = ssub.s32 %s67, 2
      %s70 = scalar_select %p68, %s69, %s67
      %p71 = scmp.eq.s32.totalorder %s30, 1
      %p72 = scmp.ge.s32.totalorder %s34, 1
      %p73 = pnand %p71, %p72
      %p74 = pneg %p73
      %s75 = ssub.s32 %s30, 1
      %s76 = scalar_select %p74, %s75, %s30
      %s77 = sadd.s32 %s34, %s76
      %p78 = scmp.ge.s32.totalorder %s77, 2
      %s79 = ssub.s32 %s77, 2
      %s80 = scalar_select %p78, %s79, %s77
      %s81 = ssub.s32 %s70, %s80
      %p82 = scmp.eq.s32.totalorder %s81, 0
      %s84 = sadd.s32 %s83, 1
      %s85 = scalar_select %p82, %s83, %s84
      %p88 = pneg %p82
      %p89 = scmp.eq.s32.totalorder %s15, 3
      %p90 = por %p88, %p89
      %p91 = scmp.ne.s32.totalorder %s83, %s86
      %p92 = scmp.eq.s32.totalorder %s15, 0
      %p93 = por %p91, %p92
      %p94 = scmp.ne.s32.totalorder %s83, %s86
      %p95 = scmp.eq.s32.totalorder %s20, 3
      %p96 = por %p94, %p95
      %p97 = scmp.ne.s32.totalorder %s86, %s87
      %p98 = scmp.eq.s32.totalorder %s20, 0
      %p99 = por %p97, %p98
      %p100 = scmp.ne.s32.totalorder %s86, %s87
      %p101 = scmp.eq.s32.totalorder %s21, 3
      %p102 = por %p100, %p101
      %p104 = scmp.ne.s32.totalorder %s87, %s103
      %p105 = scmp.eq.s32.totalorder %s21, 0
      %p106 = por %p104, %p105
      %s107 = ssub.s32 %s22, %s34
      %p108 = scmp.eq.s32.totalorder %s107, 0
      %s110 = sadd.s32 %s109, 1
      %s111 = scalar_select %p108, %s109, %s110
      %p114 = pneg %p108
      %p115 = scmp.eq.s32.totalorder %s15, 3
      %p116 = por %p114, %p115
      %p117 = scmp.ne.s32.totalorder %s109, %s112
      %p118 = scmp.eq.s32.totalorder %s15, 0
      %p119 = por %p117, %p118
      %p120 = scmp.ne.s32.totalorder %s109, %s112
      %p121 = scmp.eq.s32.totalorder %s20, 3
      %p122 = por %p120, %p121
      %p123 = scmp.ne.s32.totalorder %s112, %s113
      %p124 = scmp.eq.s32.totalorder %s20, 0
      %p125 = por %p123, %p124
      %p126 = scmp.ne.s32.totalorder %s112, %s113
      %p127 = scmp.eq.s32.totalorder %s21, 3
      %p128 = por %p126, %p127
      %p130 = scmp.ne.s32.totalorder %s113, %s129
      %p131 = scmp.eq.s32.totalorder %s21, 0
      %p132 = por %p130, %p131
      %p133 = scmp.eq.s32.totalorder %s23, 1
      %p134 = scmp.ge.s32.totalorder %s22, 1
      %p135 = pnand %p133, %p134
      %p136 = pneg %p135
      %s137 = ssub.s32 %s23, 1
      %s138 = scalar_select %p136, %s137, %s23
      %s139 = sadd.s32 %s22, %s138
      %p140 = scmp.ge.s32.totalorder %s139, 2
      %s141 = ssub.s32 %s139, 2
      %s142 = scalar_select %p140, %s141, %s139
      %p143 = scmp.eq.s32.totalorder %s30, 1
      %p144 = scmp.ge.s32.totalorder %s34, 1
      %p145 = pnand %p143, %p144
      %p146 = pneg %p145
      %s147 = ssub.s32 %s30, 1
      %s148 = scalar_select %p146, %s147, %s30
      %s149 = sadd.s32 %s34, %s148
      %p150 = scmp.ge.s32.totalorder %s149, 2
      %s151 = ssub.s32 %s149, 2
      %s152 = scalar_select %p150, %s151, %s149
      %s153 = ssub.s32 %s142, %s152
      %p154 = scmp.eq.s32.totalorder %s153, 0
      %s156 = sadd.s32 %s155, 1
      %s157 = scalar_select %p154, %s155, %s156
      %p160 = pneg %p154
      %p161 = scmp.eq.s32.totalorder %s15, 3
      %p162 = por %p160, %p161
      %p163 = scmp.ne.s32.totalorder %s155, %s158
      %p164 = scmp.eq.s32.totalorder %s15, 0
      %p165 = por %p163, %p164
      %p166 = scmp.ne.s32.totalorder %s155, %s158
      %p167 = scmp.eq.s32.totalorder %s20, 3
      %p168 = por %p166, %p167
      %p169 = scmp.ne.s32.totalorder %s158, %s159
      %p170 = scmp.eq.s32.totalorder %s20, 0
      %p171 = por %p169, %p170
      %p172 = scmp.ne.s32.totalorder %s158, %s159
      %p173 = scmp.eq.s32.totalorder %s21, 3
      %p174 = por %p172, %p173
      %p176 = scmp.ne.s32.totalorder %s159, %s175
      %p177 = scmp.eq.s32.totalorder %s21, 0
      %p178 = por %p176, %p177
      %s179 = ssub.s32 %s22, %s34
      %p180 = scmp.eq.s32.totalorder %s179, 0
      %s182 = sadd.s32 %s181, 1
      %s183 = scalar_select %p180, %s181, %s182
      %p186 = pneg %p180
      %p187 = scmp.eq.s32.totalorder %s15, 3
      %p188 = por %p186, %p187
      %p189 = scmp.ne.s32.totalorder %s181, %s184
      %p190 = scmp.eq.s32.totalorder %s15, 0
      %p191 = por %p189, %p190
      %p192 = scmp.ne.s32.totalorder %s181, %s184
      %p193 = scmp.eq.s32.totalorder %s20, 3
      %p194 = por %p192, %p193
      %p195 = scmp.ne.s32.totalorder %s184, %s185
      %p196 = scmp.eq.s32.totalorder %s20, 0
      %p197 = por %p195, %p196
      %p198 = scmp.ne.s32.totalorder %s184, %s185
      %p199 = scmp.eq.s32.totalorder %s21, 3
      %p200 = por %p198, %p199
      %p202 = scmp.ne.s32.totalorder %s185, %s201
      %p203 = scmp.eq.s32.totalorder %s21, 0
      %p204 = por %p202, %p203
      %p205 = scmp.eq.s32.totalorder %s23, 1
      %p206 = scmp.ge.s32.totalorder %s22, 1
      %p207 = pnand %p205, %p206
      %p208 = pneg %p207
      %s209 = ssub.s32 %s23, 1
      %s210 = scalar_select %p208, %s209, %s23
      %s211 = sadd.s32 %s22, %s210
      %p212 = scmp.ge.s32.totalorder %s211, 2
      %s213 = ssub.s32 %s211, 2
      %s214 = scalar_select %p212, %s213, %s211
      %p215 = scmp.eq.s32.totalorder %s30, 1
      %p216 = scmp.ge.s32.totalorder %s34, 1
      %p217 = pnand %p215, %p216
      %p218 = pneg %p217
      %s219 = ssub.s32 %s30, 1
      %s220 = scalar_select %p218, %s219, %s30
      %s221 = sadd.s32 %s34, %s220
      %p222 = scmp.ge.s32.totalorder %s221, 2
      %s223 = ssub.s32 %s221, 2
      %s224 = scalar_select %p222, %s223, %s221
      %s225 = ssub.s32 %s214, %s224
      %p226 = scmp.eq.s32.totalorder %s225, 0
      %s228 = sadd.s32 %s227, 1
      %s229 = scalar_select %p226, %s227, %s228
      %p232 = pneg %p226
      %p233 = scmp.eq.s32.totalorder %s15, 3
      %p234 = por %p232, %p233
      %p235 = scmp.ne.s32.totalorder %s227, %s230
      %p236 = scmp.eq.s32.totalorder %s15, 0
      %p237 = por %p235, %p236
      %p238 = scmp.ne.s32.totalorder %s227, %s230
      %p239 = scmp.eq.s32.totalorder %s20, 3
      %p240 = por %p238, %p239
      %p241 = scmp.ne.s32.totalorder %s230, %s231
      %p242 = scmp.eq.s32.totalorder %s20, 0
      %p243 = por %p241, %p242
      %p244 = scmp.ne.s32.totalorder %s230, %s231
      %p245 = scmp.eq.s32.totalorder %s21, 3
      %p246 = por %p244, %p245
      %p248 = scmp.ne.s32.totalorder %s231, %s247
      %p249 = scmp.eq.s32.totalorder %s21, 0
      %p250 = por %p248, %p249
      %s251 = ssub.s32 %s22, %s34
      %p252 = scmp.eq.s32.totalorder %s251, 0
      %s254 = sadd.s32 %s253, 1
      %s255 = scalar_select %p252, %s253, %s254
      %p258 = pneg %p252
      %p259 = scmp.eq.s32.totalorder %s15, 3
      %p260 = por %p258, %p259
      %p261 = scmp.ne.s32.totalorder %s253, %s256
      %p262 = scmp.eq.s32.totalorder %s15, 0
      %p263 = por %p261, %p262
      %p264 = scmp.ne.s32.totalorder %s253, %s256
      %p265 = scmp.eq.s32.totalorder %s20, 3
      %p266 = por %p264, %p265
      %p267 = scmp.ne.s32.totalorder %s256, %s257
      %p268 = scmp.eq.s32.totalorder %s20, 0
      %p269 = por %p267, %p268
      %p270 = scmp.ne.s32.totalorder %s256, %s257
      %p271 = scmp.eq.s32.totalorder %s21, 3
      %p272 = por %p270, %p271
      %p274 = scmp.ne.s32.totalorder %s257, %s273
      %p275 = scmp.eq.s32.totalorder %s21, 0
      %p276 = por %p274, %p275
      %p277 = scmp.le.s32.totalorder 1, %s15
      %p278 = scmp.lt.s32.totalorder %s15, 5
      %p279 = pnand %p277, %p278
      %p280 = pneg %p279
      // Predicated region
      $region9: #{tpu_custom_call.1} parent=5 // pred_check
        _
      $region10: #{tpu_custom_call.1} parent=5 // pred_check_branch
        %282 = sbr.rel (%p279) target = $region12
      $region11: #{tpu_custom_call.1} parent=5 // pred_region
        %s283 = ssub.s32 %s15, 1
      $region12: #{tpu_custom_call.1} parent=5 // pred_fallthru
        _
      %p284 = scmp.lt.s32.totalorder %s15, 4
      // Predicated region
      $region13: #{tpu_custom_call.1} parent=5 // pred_check
        %p285 = pneg %p284
      $region14: #{tpu_custom_call.1} parent=5 // pred_check_branch
        %287 = sbr.rel (%p285) target = $region16
      $region15: #{tpu_custom_call.1} parent=5 // pred_region
        // Predicated region
        $region17: #{tpu_custom_call.1} parent=15 // pred_check
          %p288 = pneg %p47
        $region18: #{tpu_custom_call.1} parent=15 // pred_check_branch
          %290 = sbr.rel (%p288) target = $region20
        $region19: #{tpu_custom_call.1} parent=15 // pred_region
          %s291 = smul.u32 16, %s22
          %p292 = scmp.lt.s32.totalorder %s291, 31
          %s293 = scalar_select %p292, %s291, 31
          %s294 = smul.addr %s293, 8
          %s295 = scalar_lea.vmem %s0, %s294
          %s296 = smul.u32 16, %s22
        $region20: #{tpu_custom_call.1} parent=15 // pred_fallthru
          _
        // Predicated region
        $region21: #{tpu_custom_call.1} parent=15 // pred_check
          %p297 = pneg %p93
        $region22: #{tpu_custom_call.1} parent=15 // pred_check_branch
          %299 = sbr.rel (%p297) target = $region24
        $region23: #{tpu_custom_call.1} parent=15 // pred_region
          %s300 = sand.u32 %s83, 1
          %s301 = sand.u32 %s83, 1
          %s302 = smul.addr %s301, 128
          %s303 = scalar_lea.vmem [#allocation2], %s302
          %p304 = scmp.eq.s32.totalorder %s23, 1
          %p305 = scmp.ge.s32.totalorder %s22, 1
          %p306 = pnand %p304, %p305
          %p307 = pneg %p306
          %s308 = ssub.s32 %s23, 1
          %s309 = scalar_select %p307, %s308, %s23
          %s310 = sadd.s32 %s22, %s309
          %p311 = scmp.ge.s32.totalorder %s310, 2
          %s312 = ssub.s32 %s310, 2
          %s313 = scalar_select %p311, %s312, %s310
          %s314 = smul.addr %s313, 8
          %s315 = scalar_lea.vmem %s1, %s314
          // Predicated region
          $region25: #{tpu_custom_call.1} parent=23 // pred_check
            _
          $region26: #{tpu_custom_call.1} parent=23 // pred_check_branch
            %317 = sbr.rel (0) target = $region28
          $region27: #{tpu_custom_call.1} parent=23 // pred_region
            // Predicated region
            $region29: #{tpu_custom_call.1} parent=27 // pred_check
              _
            $region30: #{tpu_custom_call.1} parent=27 // pred_check_branch
              %319 = sbr.rel (0) target = $region32
            $region31: #{tpu_custom_call.1} parent=27 // pred_region
              // Predicated region
              $region44: #{tpu_custom_call.1} parent=31 // pred_check
                _
              $region45: #{tpu_custom_call.1} parent=31 // pred_check_branch
                %365 = sbr.rel (0) target = $region47
              $region46: #{tpu_custom_call.1} parent=31 // pred_region
                loop: start=0, step=1, limit=1
                $region48: #{tpu_custom_call.1} parent=46 // loop_pre_header
                  _
                $region49: #{tpu_custom_call.1} parent=46 // loop_header
                  %s367 = sphi 0, %s371
                  %p368 = scmp.ge.s32.totalorder %s367, 1
                  %s372 = sphi %s315, %s315
                  %s373 = sphi %s303, %s303
                $region50: #{tpu_custom_call.1} parent=46 // loop_header_branch
                  %370 = sbr.rel (%p368) target = $region54
                $region51: #{tpu_custom_call.1} parent=46 // loop_body
                  %v374 = vld [vmem:[%s372] sm:$0xff]
                  %375 = vst [vmem:[%s373] sm:$0xff] %v374
                  %v376 = vld [vmem:[%s372 + $0x10] sm:$0xff]
                  %377 = vst [vmem:[%s373 + $0x8] sm:$0xff] %v376
                  %v378 = vld [vmem:[%s372 + $0x20] sm:$0xff]
                  %379 = vst [vmem:[%s373 + $0x10] sm:$0xff] %v378
                  %v380 = vld [vmem:[%s372 + $0x30] sm:$0xff]
                  %381 = vst [vmem:[%s373 + $0x18] sm:$0xff] %v380
                  %v382 = vld [vmem:[%s372 + $0x40] sm:$0xff]
                  %383 = vst [vmem:[%s373 + $0x20] sm:$0xff] %v382
                  %v384 = vld [vmem:[%s372 + $0x50] sm:$0xff]
                  %385 = vst [vmem:[%s373 + $0x28] sm:$0xff] %v384
                  %v386 = vld [vmem:[%s372 + $0x60] sm:$0xff]
                  %387 = vst [vmem:[%s373 + $0x30] sm:$0xff] %v386
                  %v388 = vld [vmem:[%s372 + $0x70] sm:$0xff]
                  %389 = vst [vmem:[%s373 + $0x38] sm:$0xff] %v388
                  %v390 = vld [vmem:[%s372 + $0x80] sm:$0xff]
                  %391 = vst [vmem:[%s373 + $0x40] sm:$0xff] %v390
                  %v392 = vld [vmem:[%s372 + $0x90] sm:$0xff]
                  %393 = vst [vmem:[%s373 + $0x48] sm:$0xff] %v392
                  %v394 = vld [vmem:[%s372 + $0xa0] sm:$0xff]
                  %395 = vst [vmem:[%s373 + $0x50] sm:$0xff] %v394
                  %v396 = vld [vmem:[%s372 + $0xb0] sm:$0xff]
                  %397 = vst [vmem:[%s373 + $0x58] sm:$0xff] %v396
                  %v398 = vld [vmem:[%s372 + $0xc0] sm:$0xff]
                  %399 = vst [vmem:[%s373 + $0x60] sm:$0xff] %v398
                  %v400 = vld [vmem:[%s372 + $0xd0] sm:$0xff]
                  %401 = vst [vmem:[%s373 + $0x68] sm:$0xff] %v400
                  %v402 = vld [vmem:[%s372 + $0xe0] sm:$0xff]
                  %403 = vst [vmem:[%s373 + $0x70] sm:$0xff] %v402
                  %v404 = vld [vmem:[%s372 + $0xf0] sm:$0xff]
                  %405 = vst [vmem:[%s373 + $0x78] sm:$0xff] %v404
                $region52: #{tpu_custom_call.1} parent=46 // loop_footer
                  %s371 = sadd.s32 1, %s367
                $region53: #{tpu_custom_call.1} parent=46 // loop_footer_branch
                  %366 = sbr.rel target = $region49
                $region54: #{tpu_custom_call.1} parent=46 // loop_exit
                  _
              $region47: #{tpu_custom_call.1} parent=31 // pred_fallthru
                _
              // Predicated region
              $region55: #{tpu_custom_call.1} parent=31 // pred_check
                _
              $region56: #{tpu_custom_call.1} parent=31 // pred_check_branch
                %407 = sbr.rel target = $region58
              $region57: #{tpu_custom_call.1} parent=31 // pred_region
                _
              $region58: #{tpu_custom_call.1} parent=31 // pred_fallthru
                _
            $region32: #{tpu_custom_call.1} parent=27 // pred_fallthru
              _
            // Predicated region
            $region33: #{tpu_custom_call.1} parent=27 // pred_check
              _
            $region34: #{tpu_custom_call.1} parent=27 // pred_check_branch
              %321 = sbr.rel target = $region36
            $region35: #{tpu_custom_call.1} parent=27 // pred_region
              %s323 = ssub.s32 256, 1
              loop: start=0, step=1, limit=1
              $region37: #{tpu_custom_call.1} parent=35 // loop_pre_header
                _
              $region38: #{tpu_custom_call.1} parent=35 // loop_header
                %s325 = sphi 0, %s329
                %p326 = scmp.ge.s32.totalorder %s325, 1
                %s330 = sphi %s315, %s315
                %s331 = sphi %s303, %s303
              $region39: #{tpu_custom_call.1} parent=35 // loop_header_branch
                %328 = sbr.rel (%p326) target = $region43
              $region40: #{tpu_custom_call.1} parent=35 // loop_body
                %v332 = vld [vmem:[%s330] sm:%s323]
                %333 = vst [vmem:[%s331] sm:%s323] %v332
                %v334 = vld [vmem:[%s330 + $0x10] sm:%s323]
                %335 = vst [vmem:[%s331 + $0x8] sm:%s323] %v334
                %v336 = vld [vmem:[%s330 + $0x20] sm:%s323]
                %337 = vst [vmem:[%s331 + $0x10] sm:%s323] %v336
                %v338 = vld [vmem:[%s330 + $0x30] sm:%s323]
                %339 = vst [vmem:[%s331 + $0x18] sm:%s323] %v338
                %v340 = vld [vmem:[%s330 + $0x40] sm:%s323]
                %341 = vst [vmem:[%s331 + $0x20] sm:%s323] %v340
                %v342 = vld [vmem:[%s330 + $0x50] sm:%s323]
                %343 = vst [vmem:[%s331 + $0x28] sm:%s323] %v342
                %v344 = vld [vmem:[%s330 + $0x60] sm:%s323]
                %345 = vst [vmem:[%s331 + $0x30] sm:%s323] %v344
                %v346 = vld [vmem:[%s330 + $0x70] sm:%s323]
                %347 = vst [vmem:[%s331 + $0x38] sm:%s323] %v346
                %v348 = vld [vmem:[%s330 + $0x80] sm:%s323]
                %349 = vst [vmem:[%s331 + $0x40] sm:%s323] %v348
                %v350 = vld [vmem:[%s330 + $0x90] sm:%s323]
                %351 = vst [vmem:[%s331 + $0x48] sm:%s323] %v350
                %v352 = vld [vmem:[%s330 + $0xa0] sm:%s323]
                %353 = vst [vmem:[%s331 + $0x50] sm:%s323] %v352
                %v354 = vld [vmem:[%s330 + $0xb0] sm:%s323]
                %355 = vst [vmem:[%s331 + $0x58] sm:%s323] %v354
                %v356 = vld [vmem:[%s330 + $0xc0] sm:%s323]
                %357 = vst [vmem:[%s331 + $0x60] sm:%s323] %v356
                %v358 = vld [vmem:[%s330 + $0xd0] sm:%s323]
                %359 = vst [vmem:[%s331 + $0x68] sm:%s323] %v358
                %v360 = vld [vmem:[%s330 + $0xe0] sm:%s323]
                %361 = vst [vmem:[%s331 + $0x70] sm:%s323] %v360
                %v362 = vld [vmem:[%s330 + $0xf0] sm:%s323]
                %363 = vst [vmem:[%s331 + $0x78] sm:%s323] %v362
              $region41: #{tpu_custom_call.1} parent=35 // loop_footer
                %s329 = sadd.s32 1, %s325
              $region42: #{tpu_custom_call.1} parent=35 // loop_footer_branch
                %324 = sbr.rel target = $region38
              $region43: #{tpu_custom_call.1} parent=35 // loop_exit
                _
            $region36: #{tpu_custom_call.1} parent=27 // pred_fallthru
              _
          $region28: #{tpu_custom_call.1} parent=23 // pred_fallthru
            _
          %408 = vnop
        $region24: #{tpu_custom_call.1} parent=15 // pred_fallthru
          _
        // Predicated region
        $region59: #{tpu_custom_call.1} parent=15 // pred_check
          %p409 = pneg %p119
        $region60: #{tpu_custom_call.1} parent=15 // pred_check_branch
          %411 = sbr.rel (%p409) target = $region62
        $region61: #{tpu_custom_call.1} parent=15 // pred_region
          %s412 = smul.u32 16, %s22
          %p413 = scmp.lt.s32.totalorder %s412, 31
          %s414 = scalar_select %p413, %s412, 31
          %s415 = smul.addr %s414, 8
          %s416 = scalar_lea.vmem %s2, %s415
          %s417 = smul.u32 16, %s22
        $region62: #{tpu_custom_call.1} parent=15 // pred_fallthru
          _
        // Predicated region
        $region63: #{tpu_custom_call.1} parent=15 // pred_check
          %p418 = pneg %p165
        $region64: #{tpu_custom_call.1} parent=15 // pred_check_branch
          %420 = sbr.rel (%p418) target = $region66
        $region65: #{tpu_custom_call.1} parent=15 // pred_region
          %p421 = scmp.eq.s32.totalorder %s23, 1
          %p422 = scmp.ge.s32.totalorder %s22, 1
          %p423 = pnand %p421, %p422
          %p424 = pneg %p423
          %s425 = ssub.s32 %s23, 1
          %s426 = scalar_select %p424, %s425, %s23
          %s427 = sadd.s32 %s22, %s426
          %p428 = scmp.ge.s32.totalorder %s427, 2
          %s429 = ssub.s32 %s427, 2
          %s430 = scalar_select %p428, %s429, %s427
          %p431 = scmp.lt.s32.totalorder %s430, 1
          %s432 = scalar_select %p431, %s430, 1
          %s433 = scalar_lea.vmem %s3, %s432
          %p434 = scmp.eq.s32.totalorder %s23, 1
          %p435 = scmp.ge.s32.totalorder %s22, 1
          %p436 = pnand %p434, %p435
          %p437 = pneg %p436
          %s438 = ssub.s32 %s23, 1
          %s439 = scalar_select %p437, %s438, %s23
          %s440 = sadd.s32 %s22, %s439
          %p441 = scmp.ge.s32.totalorder %s440, 2
          %s442 = ssub.s32 %s440, 2
          %s443 = scalar_select %p441, %s442, %s440
        $region66: #{tpu_custom_call.1} parent=15 // pred_fallthru
          _
        // Predicated region
        $region67: #{tpu_custom_call.1} parent=15 // pred_check
          %p444 = pneg %p191
        $region68: #{tpu_custom_call.1} parent=15 // pred_check_branch
          %446 = sbr.rel (%p444) target = $region70
        $region69: #{tpu_custom_call.1} parent=15 // pred_region
          %s447 = smul.u32 16, %s22
          %p448 = scmp.lt.s32.totalorder %s447, 31
          %s449 = scalar_select %p448, %s447, 31
          %s450 = smul.addr %s449, 8
          %s451 = scalar_lea.vmem %s4, %s450
          %s452 = smul.u32 16, %s22
        $region70: #{tpu_custom_call.1} parent=15 // pred_fallthru
          _
        // Predicated region
        $region71: #{tpu_custom_call.1} parent=15 // pred_check
          %p453 = pneg %p237
        $region72: #{tpu_custom_call.1} parent=15 // pred_check_branch
          %455 = sbr.rel (%p453) target = $region74
        $region73: #{tpu_custom_call.1} parent=15 // pred_region
          %p456 = scmp.eq.s32.totalorder %s23, 1
          %p457 = scmp.ge.s32.totalorder %s22, 1
          %p458 = pnand %p456, %p457
          %p459 = pneg %p458
          %s460 = ssub.s32 %s23, 1
          %s461 = scalar_select %p459, %s460, %s23
          %s462 = sadd.s32 %s22, %s461
          %p463 = scmp.ge.s32.totalorder %s462, 2
          %s464 = ssub.s32 %s462, 2
          %s465 = scalar_select %p463, %s464, %s462
          %p466 = scmp.lt.s32.totalorder %s465, 1
          %s467 = scalar_select %p466, %s465, 1
          %s468 = scalar_lea.vmem %s5, %s467
          %p469 = scmp.eq.s32.totalorder %s23, 1
          %p470 = scmp.ge.s32.totalorder %s22, 1
          %p471 = pnand %p469, %p470
          %p472 = pneg %p471
          %s473 = ssub.s32 %s23, 1
          %s474 = scalar_select %p472, %s473, %s23
          %s475 = sadd.s32 %s22, %s474
          %p476 = scmp.ge.s32.totalorder %s475, 2
          %s477 = ssub.s32 %s475, 2
          %s478 = scalar_select %p476, %s477, %s475
        $region74: #{tpu_custom_call.1} parent=15 // pred_fallthru
          _
      $region16: #{tpu_custom_call.1} parent=5 // pred_fallthru
        _
      %p479 = scmp.le.s32.totalorder 1, %s15
      %p480 = scmp.lt.s32.totalorder %s15, 5
      %p481 = pnand %p479, %p480
      %p482 = pneg %p481
      // Predicated region
      $region75: #{tpu_custom_call.1} parent=5 // pred_check
        _
      $region76: #{tpu_custom_call.1} parent=5 // pred_check_branch
        %484 = sbr.rel (%p481) target = $region78
      $region77: #{tpu_custom_call.1} parent=5 // pred_region
        %s485 = ssub.s32 %s15, 1
        %s486 = sand.u32 %s86, 1
        %s487 = sand.u32 %s86, 1
        %s488 = smul.addr %s487, 128
        %s489 = scalar_lea.vmem [#allocation2], %s488
        // Predicated region
        $region79: #{tpu_custom_call.1} parent=77 // pred_check
          %p490 = pneg %p99
        $region80: #{tpu_custom_call.1} parent=77 // pred_check_branch
          %492 = sbr.rel (%p490) target = $region82
        $region81: #{tpu_custom_call.1} parent=77 // pred_region
          _
        $region82: #{tpu_custom_call.1} parent=77 // pred_fallthru
          _
        %s493 = smul.u32 16, %s24
        %p494 = scmp.lt.s32.totalorder %s493, 31
        %s495 = scalar_select %p494, %s493, 31
        %s496 = smul.addr %s495, 8
        %s497 = scalar_lea.vmem %s0, %s496
        %p498 = pneg %p53
        %p499 = pneg %p50
        %s500 = sand.u32 %s86, 1
        %s501 = sand.u32 %s86, 1
        %s502 = smul.addr %s501, 128
        %s503 = scalar_lea.vmem [#allocation2], %s502
        %p504 = pneg %p99
        %p505 = pneg %p96
        %s506 = smul.u32 16, %s24
        %p507 = scmp.lt.s32.totalorder %s506, 31
        %s508 = scalar_select %p507, %s506, 31
        %s509 = smul.addr %s508, 8
        %s510 = scalar_lea.vmem %s2, %s509
        %p511 = pneg %p125
        %p512 = pneg %p122
        %p513 = scmp.eq.s32.totalorder %s25, 1
        %p514 = scmp.ge.s32.totalorder %s24, 1
        %p515 = pnand %p513, %p514
        %p516 = pneg %p515
        %s517 = ssub.s32 %s25, 1
        %s518 = scalar_select %p516, %s517, %s25
        %s519 = sadd.s32 %s24, %s518
        %p520 = scmp.ge.s32.totalorder %s519, 2
        %s521 = ssub.s32 %s519, 2
        %s522 = scalar_select %p520, %s521, %s519
        %p523 = scmp.lt.s32.totalorder %s522, 1
        %s524 = scalar_select %p523, %s522, 1
        %s525 = scalar_lea.vmem %s3, %s524
        %p526 = pneg %p171
        %p527 = pneg %p168
        %s528 = smul.u32 16, %s24
        %p529 = scmp.lt.s32.totalorder %s528, 31
        %s530 = scalar_select %p529, %s528, 31
        %s531 = smul.addr %s530, 8
        %s532 = scalar_lea.vmem %s4, %s531
        %p533 = pneg %p197
        %p534 = pneg %p194
        %p535 = scmp.eq.s32.totalorder %s25, 1
        %p536 = scmp.ge.s32.totalorder %s24, 1
        %p537 = pnand %p535, %p536
        %p538 = pneg %p537
        %s539 = ssub.s32 %s25, 1
        %s540 = scalar_select %p538, %s539, %s25
        %s541 = sadd.s32 %s24, %s540
        %p542 = scmp.ge.s32.totalorder %s541, 2
        %s543 = ssub.s32 %s541, 2
        %s544 = scalar_select %p542, %s543, %s541
        %p545 = scmp.lt.s32.totalorder %s544, 1
        %s546 = scalar_select %p545, %s544, 1
        %s547 = scalar_lea.vmem %s5, %s546
        %p548 = pneg %p243
        %p549 = pneg %p240
        %p550 = pneg %p269
        %p551 = pneg %p266
        %s552 = sand.u32 %s256, 1
        %s553 = scalar_lea.sflag [#allocation4], %s552
        %s554 = sand.u32 %s256, 1
        %s555 = smul.addr %s554, 8
        %s556 = scalar_lea.vmem [#allocation3], %s555
        %s557 = smul.u32 16, %s24
        %p558 = scmp.lt.s32.totalorder %s557, 31
        %s559 = scalar_select %p558, %s557, 31
        %s560 = smul.addr %s559, 8
        %s561 = scalar_lea.vmem %s0, %s560
        %s562 = smul.u32 16, %s24
        %p563 = scmp.eq.s32.totalorder %s25, 1
        %p564 = scmp.ge.s32.totalorder %s24, 1
        %p565 = pnand %p563, %p564
        %p566 = pneg %p565
        %s567 = ssub.s32 %s25, 1
        %s568 = scalar_select %p566, %s567, %s25
        %s569 = sadd.s32 %s24, %s568
        %p570 = scmp.ge.s32.totalorder %s569, 2
        %s571 = ssub.s32 %s569, 2
        %s572 = scalar_select %p570, %s571, %s569
        %s573 = smul.u32 16, %s24
        %p574 = scmp.lt.s32.totalorder %s573, 31
        %s575 = scalar_select %p574, %s573, 31
        %s576 = smul.addr %s575, 8
        %s577 = scalar_lea.vmem %s2, %s576
        %s578 = smul.u32 16, %s24
        %p579 = scmp.eq.s32.totalorder %s25, 1
        %p580 = scmp.ge.s32.totalorder %s24, 1
        %p581 = pnand %p579, %p580
        %p582 = pneg %p581
        %s583 = ssub.s32 %s25, 1
        %s584 = scalar_select %p582, %s583, %s25
        %s585 = sadd.s32 %s24, %s584
        %p586 = scmp.ge.s32.totalorder %s585, 2
        %s587 = ssub.s32 %s585, 2
        %s588 = scalar_select %p586, %s587, %s585
        %p589 = scmp.lt.s32.totalorder %s588, 1
        %s590 = scalar_select %p589, %s588, 1
        %s591 = scalar_lea.vmem %s3, %s590
        %p592 = scmp.eq.s32.totalorder %s25, 1
        %p593 = scmp.ge.s32.totalorder %s24, 1
        %p594 = pnand %p592, %p593
        %p595 = pneg %p594
        %s596 = ssub.s32 %s25, 1
        %s597 = scalar_select %p595, %s596, %s25
        %s598 = sadd.s32 %s24, %s597
        %p599 = scmp.ge.s32.totalorder %s598, 2
        %s600 = ssub.s32 %s598, 2
        %s601 = scalar_select %p599, %s600, %s598
        %s602 = smul.u32 16, %s24
        %p603 = scmp.lt.s32.totalorder %s602, 31
        %s604 = scalar_select %p603, %s602, 31
        %s605 = smul.addr %s604, 8
        %s606 = scalar_lea.vmem %s4, %s605
        %s607 = smul.u32 16, %s24
        %p608 = scmp.eq.s32.totalorder %s25, 1
        %p609 = scmp.ge.s32.totalorder %s24, 1
        %p610 = pnand %p608, %p609
        %p611 = pneg %p610
        %s612 = ssub.s32 %s25, 1
        %s613 = scalar_select %p611, %s612, %s25
        %s614 = sadd.s32 %s24, %s613
        %p615 = scmp.ge.s32.totalorder %s614, 2
        %s616 = ssub.s32 %s614, 2
        %s617 = scalar_select %p615, %s616, %s614
        %p618 = scmp.lt.s32.totalorder %s617, 1
        %s619 = scalar_select %p618, %s617, 1
        %s620 = scalar_lea.vmem %s5, %s619
        %p621 = scmp.eq.s32.totalorder %s25, 1
        %p622 = scmp.ge.s32.totalorder %s24, 1
        %p623 = pnand %p621, %p622
        %p624 = pneg %p623
        %s625 = ssub.s32 %s25, 1
        %s626 = scalar_select %p624, %s625, %s25
        %s627 = sadd.s32 %s24, %s626
        %p628 = scmp.ge.s32.totalorder %s627, 2
        %s629 = ssub.s32 %s627, 2
        %s630 = scalar_select %p628, %s629, %s627
        %p631 = scmp.eq.s32.totalorder %s25, 0
        // Predicated region
        $region83: #{tpu_custom_call.1} parent=77 // pred_check
          %p632 = pneg %p631
        $region84: #{tpu_custom_call.1} parent=77 // pred_check_branch
          %634 = sbr.rel (%p632) target = $region86
        $region85: #{tpu_custom_call.1} parent=77 // pred_region
          %v635 = vld [vmem:[%s561] sm:$0xff]
          %v636 = vld [vmem:[%s561 + $0x8] sm:$0xff]
          %v637 = vld [vmem:[%s561 + $0x10] sm:$0xff]
          %v638 = vld [vmem:[%s561 + $0x18] sm:$0xff]
          %v639 = vld [vmem:[%s561 + $0x20] sm:$0xff]
          %v640 = vld [vmem:[%s561 + $0x28] sm:$0xff]
          %v641 = vld [vmem:[%s561 + $0x30] sm:$0xff]
          %v642 = vld [vmem:[%s561 + $0x38] sm:$0xff]
          %v643 = vld [vmem:[%s561 + $0x40] sm:$0xff]
          %v644 = vld [vmem:[%s561 + $0x48] sm:$0xff]
          %v645 = vld [vmem:[%s561 + $0x50] sm:$0xff]
          %v646 = vld [vmem:[%s561 + $0x58] sm:$0xff]
          %v647 = vld [vmem:[%s561 + $0x60] sm:$0xff]
          %v648 = vld [vmem:[%s561 + $0x68] sm:$0xff]
          %v649 = vld [vmem:[%s561 + $0x70] sm:$0xff]
          %v650 = vld [vmem:[%s561 + $0x78] sm:$0xff]
          %v651 = vld [vmem:[%s489] sm:$0xff]
          %v652 = vld [vmem:[%s489 + $0x8] sm:$0xff]
          %v653 = vld [vmem:[%s489 + $0x10] sm:$0xff]
          %v654 = vld [vmem:[%s489 + $0x18] sm:$0xff]
          %v655 = vld [vmem:[%s489 + $0x20] sm:$0xff]
          %v656 = vld [vmem:[%s489 + $0x28] sm:$0xff]
          %v657 = vld [vmem:[%s489 + $0x30] sm:$0xff]
          %v658 = vld [vmem:[%s489 + $0x38] sm:$0xff]
          %v659 = vld [vmem:[%s489 + $0x40] sm:$0xff]
          %v660 = vld [vmem:[%s489 + $0x48] sm:$0xff]
          %v661 = vld [vmem:[%s489 + $0x50] sm:$0xff]
          %v662 = vld [vmem:[%s489 + $0x58] sm:$0xff]
          %v663 = vld [vmem:[%s489 + $0x60] sm:$0xff]
          %v664 = vld [vmem:[%s489 + $0x68] sm:$0xff]
          %v665 = vld [vmem:[%s489 + $0x70] sm:$0xff]
          %v666 = vld [vmem:[%s489 + $0x78] sm:$0xff]
          %667 = vmatprep.subr.mxu0 0.0
          %668 = vmatpush1.msra.mxu0 %v666
          %669 = vmatprep.subr.mxu0 0.0
          %670 = vmatpush1.msra.mxu0 %v665
          %671 = vmatprep.subr.mxu0 0.0
          %672 = vmatpush1.msra.mxu0 %v664
          %673 = vmatprep.subr.mxu0 0.0
          %674 = vmatpush1.msra.mxu0 %v663
          %675 = vmatprep.subr.mxu0 0.0
          %676 = vmatpush1.msra.mxu0 %v662
          %677 = vmatprep.subr.mxu0 0.0
          %678 = vmatpush1.msra.mxu0 %v661
          %679 = vmatprep.subr.mxu0 0.0
          %680 = vmatpush1.msra.mxu0 %v660
          %681 = vmatprep.subr.mxu0 0.0
          %682 = vmatpush1.msra.mxu0 %v659
          %683 = vmatprep.subr.mxu0 0.0
          %684 = vmatpush1.msra.mxu0 %v658
          %685 = vmatprep.subr.mxu0 0.0
          %686 = vmatpush1.msra.mxu0 %v657
          %687 = vmatprep.subr.mxu0 0.0
          %688 = vmatpush1.msra.mxu0 %v656
          %689 = vmatprep.subr.mxu0 0.0
          %690 = vmatpush1.msra.mxu0 %v655
          %691 = vmatprep.subr.mxu0 0.0
          %692 = vmatpush1.msra.mxu0 %v654
          %693 = vmatprep.subr.mxu0 0.0
          %694 = vmatpush1.msra.mxu0 %v653
          %695 = vmatprep.subr.mxu0 0.0
          %696 = vmatpush1.msra.mxu0 %v652
          %697 = vmatprep.subr.mxu0 0.0
          %698 = vmatpush1.msra.mxu0 %v651
          %699 = vmatprep.subr.mxu0 0.0
          %700 = vmatpush2.msra.mxu0 0.0
          %701 = vmatprep.subr.mxu0 0.0
          %702 = vmatpush2.msra.mxu0 0.0
          %703 = vmatprep.subr.mxu0 0.0
          %704 = vmatpush2.msra.mxu0 0.0
          %705 = vmatprep.subr.mxu0 0.0
          %706 = vmatpush2.msra.mxu0 0.0
          %707 = vmatprep.subr.mxu0 0.0
          %708 = vmatpush2.msra.mxu0 0.0
          %709 = vmatprep.subr.mxu0 0.0
          %710 = vmatpush2.msra.mxu0 0.0
          %711 = vmatprep.subr.mxu0 0.0
          %712 = vmatpush2.msra.mxu0 0.0
          %713 = vmatprep.subr.mxu0 0.0
          %714 = vmatpush2.msra.mxu0 0.0
          %715 = vmatprep.subr.mxu0 0.0
          %716 = vmatpush2.msra.mxu0 0.0
          %717 = vmatprep.subr.mxu0 0.0
          %718 = vmatpush2.msra.mxu0 0.0
          %719 = vmatprep.subr.mxu0 0.0
          %720 = vmatpush2.msra.mxu0 0.0
          %721 = vmatprep.subr.mxu0 0.0
          %722 = vmatpush2.msra.mxu0 0.0
          %723 = vmatprep.subr.mxu0 0.0
          %724 = vmatpush2.msra.mxu0 0.0
          %725 = vmatprep.subr.mxu0 0.0
          %726 = vmatpush2.msra.mxu0 0.0
          %727 = vmatprep.subr.mxu0 0.0
          %728 = vmatpush2.msra.mxu0 0.0
          %729 = vmatprep.subr.mxu0 0.0
          %730 = vmatpush2.msra.mxu0 0.0
          %731 = vmatprep.mubr.f32.mxu0 0.0
          %732 = vmatmul.mubr.f32.gmra.mxu0 %v635
          %v733 = vpop.f32.mrf.mxu0
          %v734 = vadd.f32 0.0, %v733
          %v735 = vpop.f32.mrf.mxu0
          %736 = vmatprep.mubr.f32.mxu0 0.0
          %737 = vmatmul.mubr.f32.gmra.mxu0 %v636
          %v738 = vpop.f32.mrf.mxu0
          %v739 = vadd.f32 0.0, %v738
          %v740 = vpop.f32.mrf.mxu0
          %741 = vmatprep.mubr.f32.mxu0 0.0
          %742 = vmatmul.mubr.f32.gmra.mxu0 %v637
          %v743 = vpop.f32.mrf.mxu0
          %v744 = vadd.f32 0.0, %v743
          %v745 = vpop.f32.mrf.mxu0
          %746 = vmatprep.mubr.f32.mxu0 0.0
          %747 = vmatmul.mubr.f32.gmra.mxu0 %v638
          %v748 = vpop.f32.mrf.mxu0
          %v749 = vadd.f32 0.0, %v748
          %v750 = vpop.f32.mrf.mxu0
          %751 = vmatprep.mubr.f32.mxu0 0.0
          %752 = vmatmul.mubr.f32.gmra.mxu0 %v639
          %v753 = vpop.f32.mrf.mxu0
          %v754 = vadd.f32 0.0, %v753
          %v755 = vpop.f32.mrf.mxu0
          %756 = vmatprep.mubr.f32.mxu0 0.0
          %757 = vmatmul.mubr.f32.gmra.mxu0 %v640
          %v758 = vpop.f32.mrf.mxu0
          %v759 = vadd.f32 0.0, %v758
          %v760 = vpop.f32.mrf.mxu0
          %761 = vmatprep.mubr.f32.mxu0 0.0
          %762 = vmatmul.mubr.f32.gmra.mxu0 %v641
          %v763 = vpop.f32.mrf.mxu0
          %v764 = vadd.f32 0.0, %v763
          %v765 = vpop.f32.mrf.mxu0
          %766 = vmatprep.mubr.f32.mxu0 0.0
          %767 = vmatmul.mubr.f32.gmra.mxu0 %v642
          %v768 = vpop.f32.mrf.mxu0
          %v769 = vadd.f32 0.0, %v768
          %v770 = vpop.f32.mrf.mxu0
          %771 = vmatprep.mubr.f32.mxu0 0.0
          %772 = vmatmul.mubr.f32.gmra.mxu0 %v643
          %v773 = vpop.f32.mrf.mxu0
          %v774 = vadd.f32 0.0, %v773
          %v775 = vpop.f32.mrf.mxu0
          %776 = vmatprep.mubr.f32.mxu0 0.0
          %777 = vmatmul.mubr.f32.gmra.mxu0 %v644
          %v778 = vpop.f32.mrf.mxu0
          %v779 = vadd.f32 0.0, %v778
          %v780 = vpop.f32.mrf.mxu0
          %781 = vmatprep.mubr.f32.mxu0 0.0
          %782 = vmatmul.mubr.f32.gmra.mxu0 %v645
          %v783 = vpop.f32.mrf.mxu0
          %v784 = vadd.f32 0.0, %v783
          %v785 = vpop.f32.mrf.mxu0
          %786 = vmatprep.mubr.f32.mxu0 0.0
          %787 = vmatmul.mubr.f32.gmra.mxu0 %v646
          %v788 = vpop.f32.mrf.mxu0
          %v789 = vadd.f32 0.0, %v788
          %v790 = vpop.f32.mrf.mxu0
          %791 = vmatprep.mubr.f32.mxu0 0.0
          %792 = vmatmul.mubr.f32.gmra.mxu0 %v647
          %v793 = vpop.f32.mrf.mxu0
          %v794 = vadd.f32 0.0, %v793
          %v795 = vpop.f32.mrf.mxu0
          %796 = vmatprep.mubr.f32.mxu0 0.0
          %797 = vmatmul.mubr.f32.gmra.mxu0 %v648
          %v798 = vpop.f32.mrf.mxu0
          %v799 = vadd.f32 0.0, %v798
          %v800 = vpop.f32.mrf.mxu0
          %801 = vmatprep.mubr.f32.mxu0 0.0
          %802 = vmatmul.mubr.f32.gmra.mxu0 %v649
          %v803 = vpop.f32.mrf.mxu0
          %v804 = vadd.f32 0.0, %v803
          %v805 = vpop.f32.mrf.mxu0
          %806 = vmatprep.mubr.f32.mxu0 0.0
          %807 = vmatmul.mubr.f32.gmra.mxu0 %v650
          %v808 = vpop.f32.mrf.mxu0
          %v809 = vadd.f32 0.0, %v808
          %v810 = vpop.f32.mrf.mxu0
          %811 = vdwg.mxu0
          %v812 = vld [vmem:[%s577] sm:$0xff]
          %v813 = vld [vmem:[%s577 + $0x8] sm:$0xff]
          %v814 = vld [vmem:[%s577 + $0x10] sm:$0xff]
          %v815 = vld [vmem:[%s577 + $0x18] sm:$0xff]
          %v816 = vld [vmem:[%s577 + $0x20] sm:$0xff]
          %v817 = vld [vmem:[%s577 + $0x28] sm:$0xff]
          %v818 = vld [vmem:[%s577 + $0x30] sm:$0xff]
          %v819 = vld [vmem:[%s577 + $0x38] sm:$0xff]
          %v820 = vld [vmem:[%s577 + $0x40] sm:$0xff]
          %v821 = vld [vmem:[%s577 + $0x48] sm:$0xff]
          %v822 = vld [vmem:[%s577 + $0x50] sm:$0xff]
          %v823 = vld [vmem:[%s577 + $0x58] sm:$0xff]
          %v824 = vld [vmem:[%s577 + $0x60] sm:$0xff]
          %v825 = vld [vmem:[%s577 + $0x68] sm:$0xff]
          %v826 = vld [vmem:[%s577 + $0x70] sm:$0xff]
          %v827 = vld [vmem:[%s577 + $0x78] sm:$0xff]
          %v828 = vld [vmem:[%s591] sm:$0x1]
          %830 = vset.pattern.permute.xlu0 0
          %831 = vperm.xlu0 %830, %v812
          %v832 = vpop.permute.xlu0 %831
          %835 = vset.pattern.permute.xlu0 0
          %836 = vperm.xlu0 %835, %v813
          %v837 = vpop.permute.xlu0 %836
          %840 = vset.pattern.permute.xlu0 0
          %841 = vperm.xlu0 %840, %v814
          %v842 = vpop.permute.xlu0 %841
          %845 = vset.pattern.permute.xlu0 0
          %846 = vperm.xlu0 %845, %v815
          %v847 = vpop.permute.xlu0 %846
          %850 = vset.pattern.permute.xlu0 0
          %851 = vperm.xlu0 %850, %v816
          %v852 = vpop.permute.xlu0 %851
          %855 = vset.pattern.permute.xlu0 0
          %856 = vperm.xlu0 %855, %v817
          %v857 = vpop.permute.xlu0 %856
          %860 = vset.pattern.permute.xlu0 0
          %861 = vperm.xlu0 %860, %v818
          %v862 = vpop.permute.xlu0 %861
          %865 = vset.pattern.permute.xlu0 0
          %866 = vperm.xlu0 %865, %v819
          %v867 = vpop.permute.xlu0 %866
          %870 = vset.pattern.permute.xlu0 0
          %871 = vperm.xlu0 %870, %v820
          %v872 = vpop.permute.xlu0 %871
          %875 = vset.pattern.permute.xlu0 0
          %876 = vperm.xlu0 %875, %v821
          %v877 = vpop.permute.xlu0 %876
          %880 = vset.pattern.permute.xlu0 0
          %881 = vperm.xlu0 %880, %v822
          %v882 = vpop.permute.xlu0 %881
          %885 = vset.pattern.permute.xlu0 0
          %886 = vperm.xlu0 %885, %v823
          %v887 = vpop.permute.xlu0 %886
          %890 = vset.pattern.permute.xlu0 0
          %891 = vperm.xlu0 %890, %v824
          %v892 = vpop.permute.xlu0 %891
          %895 = vset.pattern.permute.xlu0 0
          %896 = vperm.xlu0 %895, %v825
          %v897 = vpop.permute.xlu0 %896
          %900 = vset.pattern.permute.xlu0 0
          %901 = vperm.xlu0 %900, %v826
          %v902 = vpop.permute.xlu0 %901
          %905 = vset.pattern.permute.xlu0 0
          %906 = vperm.xlu0 %905, %v827
          %v907 = vpop.permute.xlu0 %906
          %v910 = vlaneseq
          %v911 = vshrl.u32 %v910, 7
          %v912 = vsub.s32 0, %v911
          %v913 = vrot.slane %v828, %v912
          %v915 = vadd.f32 %v832, %v913
          %v916 = vadd.f32 %v837, %v913
          %v917 = vadd.f32 %v842, %v913
          %v918 = vadd.f32 %v847, %v913
          %v919 = vadd.f32 %v852, %v913
          %v920 = vadd.f32 %v857, %v913
          %v921 = vadd.f32 %v862, %v913
          %v922 = vadd.f32 %v867, %v913
          %v923 = vadd.f32 %v872, %v913
          %v924 = vadd.f32 %v877, %v913
          %v925 = vadd.f32 %v882, %v913
          %v926 = vadd.f32 %v887, %v913
          %v927 = vadd.f32 %v892, %v913
          %v928 = vadd.f32 %v897, %v913
          %v929 = vadd.f32 %v902, %v913
          %v930 = vadd.f32 %v907, %v913
          %v931 = vmul.f32 %v734, 2.0
          %v932 = vmul.f32 %v739, 2.0
          %v933 = vmul.f32 %v744, 2.0
          %v934 = vmul.f32 %v749, 2.0
          %v935 = vmul.f32 %v754, 2.0
          %v936 = vmul.f32 %v759, 2.0
          %v937 = vmul.f32 %v764, 2.0
          %v938 = vmul.f32 %v769, 2.0
          %v939 = vmul.f32 %v774, 2.0
          %v940 = vmul.f32 %v779, 2.0
          %v941 = vmul.f32 %v784, 2.0
          %v942 = vmul.f32 %v789, 2.0
          %v943 = vmul.f32 %v794, 2.0
          %v944 = vmul.f32 %v799, 2.0
          %v945 = vmul.f32 %v804, 2.0
          %v946 = vmul.f32 %v809, 2.0
          %v947 = vsub.f32 %v915, %v931
          %v948 = vsub.f32 %v916, %v932
          %v949 = vsub.f32 %v917, %v933
          %v950 = vsub.f32 %v918, %v934
          %v951 = vsub.f32 %v919, %v935
          %v952 = vsub.f32 %v920, %v936
          %v953 = vsub.f32 %v921, %v937
          %v954 = vsub.f32 %v922, %v938
          %v955 = vsub.f32 %v923, %v939
          %v956 = vsub.f32 %v924, %v940
          %v957 = vsub.f32 %v925, %v941
          %v958 = vsub.f32 %v926, %v942
          %v959 = vsub.f32 %v927, %v943
          %v960 = vsub.f32 %v928, %v944
          %v961 = vsub.f32 %v929, %v945
          %v962 = vsub.f32 %v930, %v946
          %v963 = vmax.f32 %v947, 0.0
          %v964 = vmax.f32 %v948, 0.0
          %v965 = vmax.f32 %v949, 0.0
          %v966 = vmax.f32 %v950, 0.0
          %v967 = vmax.f32 %v951, 0.0
          %v968 = vmax.f32 %v952, 0.0
          %v969 = vmax.f32 %v953, 0.0
          %v970 = vmax.f32 %v954, 0.0
          %v971 = vmax.f32 %v955, 0.0
          %v972 = vmax.f32 %v956, 0.0
          %v973 = vmax.f32 %v957, 0.0
          %v974 = vmax.f32 %v958, 0.0
          %v975 = vmax.f32 %v959, 0.0
          %v976 = vmax.f32 %v960, 0.0
          %v977 = vmax.f32 %v961, 0.0
          %v978 = vmax.f32 %v962, 0.0
          %v979 = vrsqrt.pop %v963
          %v980 = vmul.f32 %v963, %v979
          %vm981 = vcmp.eq.f32.partialorder %v963, inf
          %v982 = vsel %vm981, %v963, %v980
          %vm983 = vcmp.eq.f32.partialorder %v963, 0.0
          %v984 = vand.u32 %v963, 2147483648
          %v985 = vsel %vm983, %v984, %v982
          %v986 = vrsqrt.pop %v964
          %v987 = vmul.f32 %v964, %v986
          %vm988 = vcmp.eq.f32.partialorder %v964, inf
          %v989 = vsel %vm988, %v964, %v987
          %vm990 = vcmp.eq.f32.partialorder %v964, 0.0
          %v991 = vand.u32 %v964, 2147483648
          %v992 = vsel %vm990, %v991, %v989
          %v993 = vrsqrt.pop %v965
          %v994 = vmul.f32 %v965, %v993
          %vm995 = vcmp.eq.f32.partialorder %v965, inf
          %v996 = vsel %vm995, %v965, %v994
          %vm997 = vcmp.eq.f32.partialorder %v965, 0.0
          %v998 = vand.u32 %v965, 2147483648
          %v999 = vsel %vm997, %v998, %v996
          %v1000 = vrsqrt.pop %v966
          %v1001 = vmul.f32 %v966, %v1000
          %vm1002 = vcmp.eq.f32.partialorder %v966, inf
          %v1003 = vsel %vm1002, %v966, %v1001
          %vm1004 = vcmp.eq.f32.partialorder %v966, 0.0
          %v1005 = vand.u32 %v966, 2147483648
          %v1006 = vsel %vm1004, %v1005, %v1003
          %v1007 = vrsqrt.pop %v967
          %v1008 = vmul.f32 %v967, %v1007
          %vm1009 = vcmp.eq.f32.partialorder %v967, inf
          %v1010 = vsel %vm1009, %v967, %v1008
          %vm1011 = vcmp.eq.f32.partialorder %v967, 0.0
          %v1012 = vand.u32 %v967, 2147483648
          %v1013 = vsel %vm1011, %v1012, %v1010
          %v1014 = vrsqrt.pop %v968
          %v1015 = vmul.f32 %v968, %v1014
          %vm1016 = vcmp.eq.f32.partialorder %v968, inf
          %v1017 = vsel %vm1016, %v968, %v1015
          %vm1018 = vcmp.eq.f32.partialorder %v968, 0.0
          %v1019 = vand.u32 %v968, 2147483648
          %v1020 = vsel %vm1018, %v1019, %v1017
          %v1021 = vrsqrt.pop %v969
          %v1022 = vmul.f32 %v969, %v1021
          %vm1023 = vcmp.eq.f32.partialorder %v969, inf
          %v1024 = vsel %vm1023, %v969, %v1022
          %vm1025 = vcmp.eq.f32.partialorder %v969, 0.0
          %v1026 = vand.u32 %v969, 2147483648
          %v1027 = vsel %vm1025, %v1026, %v1024
          %v1028 = vrsqrt.pop %v970
          %v1029 = vmul.f32 %v970, %v1028
          %vm1030 = vcmp.eq.f32.partialorder %v970, inf
          %v1031 = vsel %vm1030, %v970, %v1029
          %vm1032 = vcmp.eq.f32.partialorder %v970, 0.0
          %v1033 = vand.u32 %v970, 2147483648
          %v1034 = vsel %vm1032, %v1033, %v1031
          %v1035 = vrsqrt.pop %v971
          %v1036 = vmul.f32 %v971, %v1035
          %vm1037 = vcmp.eq.f32.partialorder %v971, inf
          %v1038 = vsel %vm1037, %v971, %v1036
          %vm1039 = vcmp.eq.f32.partialorder %v971, 0.0
          %v1040 = vand.u32 %v971, 2147483648
          %v1041 = vsel %vm1039, %v1040, %v1038
          %v1042 = vrsqrt.pop %v972
          %v1043 = vmul.f32 %v972, %v1042
          %vm1044 = vcmp.eq.f32.partialorder %v972, inf
          %v1045 = vsel %vm1044, %v972, %v1043
          %vm1046 = vcmp.eq.f32.partialorder %v972, 0.0
          %v1047 = vand.u32 %v972, 2147483648
          %v1048 = vsel %vm1046, %v1047, %v1045
          %v1049 = vrsqrt.pop %v973
          %v1050 = vmul.f32 %v973, %v1049
          %vm1051 = vcmp.eq.f32.partialorder %v973, inf
          %v1052 = vsel %vm1051, %v973, %v1050
          %vm1053 = vcmp.eq.f32.partialorder %v973, 0.0
          %v1054 = vand.u32 %v973, 2147483648
          %v1055 = vsel %vm1053, %v1054, %v1052
          %v1056 = vrsqrt.pop %v974
          %v1057 = vmul.f32 %v974, %v1056
          %vm1058 = vcmp.eq.f32.partialorder %v974, inf
          %v1059 = vsel %vm1058, %v974, %v1057
          %vm1060 = vcmp.eq.f32.partialorder %v974, 0.0
          %v1061 = vand.u32 %v974, 2147483648
          %v1062 = vsel %vm1060, %v1061, %v1059
          %v1063 = vrsqrt.pop %v975
          %v1064 = vmul.f32 %v975, %v1063
          %vm1065 = vcmp.eq.f32.partialorder %v975, inf
          %v1066 = vsel %vm1065, %v975, %v1064
          %vm1067 = vcmp.eq.f32.partialorder %v975, 0.0
          %v1068 = vand.u32 %v975, 2147483648
          %v1069 = vsel %vm1067, %v1068, %v1066
          %v1070 = vrsqrt.pop %v976
          %v1071 = vmul.f32 %v976, %v1070
          %vm1072 = vcmp.eq.f32.partialorder %v976, inf
          %v1073 = vsel %vm1072, %v976, %v1071
          %vm1074 = vcmp.eq.f32.partialorder %v976, 0.0
          %v1075 = vand.u32 %v976, 2147483648
          %v1076 = vsel %vm1074, %v1075, %v1073
          %v1077 = vrsqrt.pop %v977
          %v1078 = vmul.f32 %v977, %v1077
          %vm1079 = vcmp.eq.f32.partialorder %v977, inf
          %v1080 = vsel %vm1079, %v977, %v1078
          %vm1081 = vcmp.eq.f32.partialorder %v977, 0.0
          %v1082 = vand.u32 %v977, 2147483648
          %v1083 = vsel %vm1081, %v1082, %v1080
          %v1084 = vrsqrt.pop %v978
          %v1085 = vmul.f32 %v978, %v1084
          %vm1086 = vcmp.eq.f32.partialorder %v978, inf
          %v1087 = vsel %vm1086, %v978, %v1085
          %vm1088 = vcmp.eq.f32.partialorder %v978, 0.0
          %v1089 = vand.u32 %v978, 2147483648
          %v1090 = vsel %vm1088, %v1089, %v1087
          %v1091 = vsub.f32 1.0, %v985
          %v1092 = vsub.f32 1.0, %v992
          %v1093 = vsub.f32 1.0, %v999
          %v1094 = vsub.f32 1.0, %v1006
          %v1095 = vsub.f32 1.0, %v1013
          %v1096 = vsub.f32 1.0, %v1020
          %v1097 = vsub.f32 1.0, %v1027
          %v1098 = vsub.f32 1.0, %v1034
          %v1099 = vsub.f32 1.0, %v1041
          %v1100 = vsub.f32 1.0, %v1048
          %v1101 = vsub.f32 1.0, %v1055
          %v1102 = vsub.f32 1.0, %v1062
          %v1103 = vsub.f32 1.0, %v1069
          %v1104 = vsub.f32 1.0, %v1076
          %v1105 = vsub.f32 1.0, %v1083
          %v1106 = vsub.f32 1.0, %v1090
          %v1107 = vmax.f32 %v1091, 0.0
          %v1108 = vmax.f32 %v1092, 0.0
          %v1109 = vmax.f32 %v1093, 0.0
          %v1110 = vmax.f32 %v1094, 0.0
          %v1111 = vmax.f32 %v1095, 0.0
          %v1112 = vmax.f32 %v1096, 0.0
          %v1113 = vmax.f32 %v1097, 0.0
          %v1114 = vmax.f32 %v1098, 0.0
          %v1115 = vmax.f32 %v1099, 0.0
          %v1116 = vmax.f32 %v1100, 0.0
          %v1117 = vmax.f32 %v1101, 0.0
          %v1118 = vmax.f32 %v1102, 0.0
          %v1119 = vmax.f32 %v1103, 0.0
          %v1120 = vmax.f32 %v1104, 0.0
          %v1121 = vmax.f32 %v1105, 0.0
          %v1122 = vmax.f32 %v1106, 0.0
          %v1123 = vld [vmem:[%s606] sm:$0xff]
          %v1124 = vld [vmem:[%s606 + $0x8] sm:$0xff]
          %v1125 = vld [vmem:[%s606 + $0x10] sm:$0xff]
          %v1126 = vld [vmem:[%s606 + $0x18] sm:$0xff]
          %v1127 = vld [vmem:[%s606 + $0x20] sm:$0xff]
          %v1128 = vld [vmem:[%s606 + $0x28] sm:$0xff]
          %v1129 = vld [vmem:[%s606 + $0x30] sm:$0xff]
          %v1130 = vld [vmem:[%s606 + $0x38] sm:$0xff]
          %v1131 = vld [vmem:[%s606 + $0x40] sm:$0xff]
          %v1132 = vld [vmem:[%s606 + $0x48] sm:$0xff]
          %v1133 = vld [vmem:[%s606 + $0x50] sm:$0xff]
          %v1134 = vld [vmem:[%s606 + $0x58] sm:$0xff]
          %v1135 = vld [vmem:[%s606 + $0x60] sm:$0xff]
          %v1136 = vld [vmem:[%s606 + $0x68] sm:$0xff]
          %v1137 = vld [vmem:[%s606 + $0x70] sm:$0xff]
          %v1138 = vld [vmem:[%s606 + $0x78] sm:$0xff]
          %v1139 = vld [vmem:[%s620] sm:$0x1]
          %1140 = vset.pattern.permute.xlu0 0
          %1141 = vperm.xlu0 %1140, %v1123
          %v1142 = vpop.permute.xlu0 %1141
          %1143 = vset.pattern.permute.xlu0 0
          %1144 = vperm.xlu0 %1143, %v1124
          %v1145 = vpop.permute.xlu0 %1144
          %1146 = vset.pattern.permute.xlu0 0
          %1147 = vperm.xlu0 %1146, %v1125
          %v1148 = vpop.permute.xlu0 %1147
          %1149 = vset.pattern.permute.xlu0 0
          %1150 = vperm.xlu0 %1149, %v1126
          %v1151 = vpop.permute.xlu0 %1150
          %1152 = vset.pattern.permute.xlu0 0
          %1153 = vperm.xlu0 %1152, %v1127
          %v1154 = vpop.permute.xlu0 %1153
          %1155 = vset.pattern.permute.xlu0 0
          %1156 = vperm.xlu0 %1155, %v1128
          %v1157 = vpop.permute.xlu0 %1156
          %1158 = vset.pattern.permute.xlu0 0
          %1159 = vperm.xlu0 %1158, %v1129
          %v1160 = vpop.permute.xlu0 %1159
          %1161 = vset.pattern.permute.xlu0 0
          %1162 = vperm.xlu0 %1161, %v1130
          %v1163 = vpop.permute.xlu0 %1162
          %1164 = vset.pattern.permute.xlu0 0
          %1165 = vperm.xlu0 %1164, %v1131
          %v1166 = vpop.permute.xlu0 %1165
          %1167 = vset.pattern.permute.xlu0 0
          %1168 = vperm.xlu0 %1167, %v1132
          %v1169 = vpop.permute.xlu0 %1168
          %1170 = vset.pattern.permute.xlu0 0
          %1171 = vperm.xlu0 %1170, %v1133
          %v1172 = vpop.permute.xlu0 %1171
          %1173 = vset.pattern.permute.xlu0 0
          %1174 = vperm.xlu0 %1173, %v1134
          %v1175 = vpop.permute.xlu0 %1174
          %1176 = vset.pattern.permute.xlu0 0
          %1177 = vperm.xlu0 %1176, %v1135
          %v1178 = vpop.permute.xlu0 %1177
          %1179 = vset.pattern.permute.xlu0 0
          %1180 = vperm.xlu0 %1179, %v1136
          %v1181 = vpop.permute.xlu0 %1180
          %1182 = vset.pattern.permute.xlu0 0
          %1183 = vperm.xlu0 %1182, %v1137
          %v1184 = vpop.permute.xlu0 %1183
          %1185 = vset.pattern.permute.xlu0 0
          %1186 = vperm.xlu0 %1185, %v1138
          %v1187 = vpop.permute.xlu0 %1186
          %v1188 = vlaneseq
          %v1189 = vshrl.u32 %v1188, 7
          %v1190 = vsub.s32 0, %v1189
          %v1191 = vrot.slane %v1139, %v1190
          %vm1192 = vcmp.eq.s32.totalorder %v1142, %v1191
          %vm1193 = vcmp.eq.s32.totalorder %v1145, %v1191
          %vm1194 = vcmp.eq.s32.totalorder %v1148, %v1191
          %vm1195 = vcmp.eq.s32.totalorder %v1151, %v1191
          %vm1196 = vcmp.eq.s32.totalorder %v1154, %v1191
          %vm1197 = vcmp.eq.s32.totalorder %v1157, %v1191
          %vm1198 = vcmp.eq.s32.totalorder %v1160, %v1191
          %vm1199 = vcmp.eq.s32.totalorder %v1163, %v1191
          %vm1200 = vcmp.eq.s32.totalorder %v1166, %v1191
          %vm1201 = vcmp.eq.s32.totalorder %v1169, %v1191
          %vm1202 = vcmp.eq.s32.totalorder %v1172, %v1191
          %vm1203 = vcmp.eq.s32.totalorder %v1175, %v1191
          %vm1204 = vcmp.eq.s32.totalorder %v1178, %v1191
          %vm1205 = vcmp.eq.s32.totalorder %v1181, %v1191
          %vm1206 = vcmp.eq.s32.totalorder %v1184, %v1191
          %vm1207 = vcmp.eq.s32.totalorder %v1187, %v1191
          %v1208 = vmul.f32 %v1107, %v1107
          %v1209 = vmul.f32 %v1108, %v1108
          %v1210 = vmul.f32 %v1109, %v1109
          %v1211 = vmul.f32 %v1110, %v1110
          %v1212 = vmul.f32 %v1111, %v1111
          %v1213 = vmul.f32 %v1112, %v1112
          %v1214 = vmul.f32 %v1113, %v1113
          %v1215 = vmul.f32 %v1114, %v1114
          %v1216 = vmul.f32 %v1115, %v1115
          %v1217 = vmul.f32 %v1116, %v1116
          %v1218 = vmul.f32 %v1117, %v1117
          %v1219 = vmul.f32 %v1118, %v1118
          %v1220 = vmul.f32 %v1119, %v1119
          %v1221 = vmul.f32 %v1120, %v1120
          %v1222 = vmul.f32 %v1121, %v1121
          %v1223 = vmul.f32 %v1122, %v1122
          %v1224 = vsel %vm1192, %v963, %v1208
          %v1225 = vsel %vm1193, %v964, %v1209
          %v1226 = vsel %vm1194, %v965, %v1210
          %v1227 = vsel %vm1195, %v966, %v1211
          %v1228 = vsel %vm1196, %v967, %v1212
          %v1229 = vsel %vm1197, %v968, %v1213
          %v1230 = vsel %vm1198, %v969, %v1214
          %v1231 = vsel %vm1199, %v970, %v1215
          %v1232 = vsel %vm1200, %v971, %v1216
          %v1233 = vsel %vm1201, %v972, %v1217
          %v1234 = vsel %vm1202, %v973, %v1218
          %v1235 = vsel %vm1203, %v974, %v1219
          %v1236 = vsel %vm1204, %v975, %v1220
          %v1237 = vsel %vm1205, %v976, %v1221
          %v1238 = vsel %vm1206, %v977, %v1222
          %v1239 = vsel %vm1207, %v978, %v1223
          %v1240 = vlaneseq
          %v1241 = vshrl.u32 %v1240, 7
          %v1242 = vadd.s32 %v1241, 8
          %v1243 = vadd.s32 %v1241, 16
          %v1244 = vadd.s32 %v1241, 24
          %v1245 = vadd.s32 %v1241, 32
          %v1246 = vadd.s32 %v1241, 40
          %v1247 = vadd.s32 %v1241, 48
          %v1248 = vadd.s32 %v1241, 56
          %v1249 = vadd.s32 %v1241, 64
          %v1250 = vadd.s32 %v1241, 72
          %v1251 = vadd.s32 %v1241, 80
          %v1252 = vadd.s32 %v1241, 88
          %v1253 = vadd.s32 %v1241, 96
          %v1254 = vadd.s32 %v1241, 104
          %v1255 = vadd.s32 %v1241, 112
          %v1256 = vadd.s32 %v1241, 120
          %v1257 = vlaneseq
          %v1258 = vand.u32 %v1257, 127
          %vm1259 = vcmp.eq.s32.totalorder %v1241, %v1258
          %vm1260 = vcmp.eq.s32.totalorder %v1242, %v1258
          %vm1261 = vcmp.eq.s32.totalorder %v1243, %v1258
          %vm1262 = vcmp.eq.s32.totalorder %v1244, %v1258
          %vm1263 = vcmp.eq.s32.totalorder %v1245, %v1258
          %vm1264 = vcmp.eq.s32.totalorder %v1246, %v1258
          %vm1265 = vcmp.eq.s32.totalorder %v1247, %v1258
          %vm1266 = vcmp.eq.s32.totalorder %v1248, %v1258
          %vm1267 = vcmp.eq.s32.totalorder %v1249, %v1258
          %vm1268 = vcmp.eq.s32.totalorder %v1250, %v1258
          %vm1269 = vcmp.eq.s32.totalorder %v1251, %v1258
          %vm1270 = vcmp.eq.s32.totalorder %v1252, %v1258
          %vm1271 = vcmp.eq.s32.totalorder %v1253, %v1258
          %vm1272 = vcmp.eq.s32.totalorder %v1254, %v1258
          %vm1273 = vcmp.eq.s32.totalorder %v1255, %v1258
          %vm1274 = vcmp.eq.s32.totalorder %v1256, %v1258
          %v1275 = vsel %vm1259, 0.0, %v1224
          %v1276 = vsel %vm1260, 0.0, %v1225
          %v1277 = vsel %vm1261, 0.0, %v1226
          %v1278 = vsel %vm1262, 0.0, %v1227
          %v1279 = vsel %vm1263, 0.0, %v1228
          %v1280 = vsel %vm1264, 0.0, %v1229
          %v1281 = vsel %vm1265, 0.0, %v1230
          %v1282 = vsel %vm1266, 0.0, %v1231
          %v1283 = vsel %vm1267, 0.0, %v1232
          %v1284 = vsel %vm1268, 0.0, %v1233
          %v1285 = vsel %vm1269, 0.0, %v1234
          %v1286 = vsel %vm1270, 0.0, %v1235
          %v1287 = vsel %vm1271, 0.0, %v1236
          %v1288 = vsel %vm1272, 0.0, %v1237
          %v1289 = vsel %vm1273, 0.0, %v1238
          %v1290 = vsel %vm1274, 0.0, %v1239
          %v1291 = vadd.f32 %v1275, %v1276
          %v1292 = vadd.f32 %v1291, %v1277
          %v1293 = vadd.f32 %v1292, %v1278
          %v1294 = vadd.f32 %v1293, %v1279
          %v1295 = vadd.f32 %v1294, %v1280
          %v1296 = vadd.f32 %v1295, %v1281
          %v1297 = vadd.f32 %v1296, %v1282
          %v1298 = vadd.f32 %v1297, %v1283
          %v1299 = vadd.f32 %v1298, %v1284
          %v1300 = vadd.f32 %v1299, %v1285
          %v1301 = vadd.f32 %v1300, %v1286
          %v1302 = vadd.f32 %v1301, %v1287
          %v1303 = vadd.f32 %v1302, %v1288
          %v1304 = vadd.f32 %v1303, %v1289
          %v1305 = vadd.f32 %v1304, %v1290
          %v1306 = vmul.f32 %v1305, 0.5
          %1307 = vst [vmem:[%s556] sm:$0xff] %v1306
        $region86: #{tpu_custom_call.1} parent=77 // pred_fallthru
          _
        %p1308 = scmp.gt.s32.totalorder %s25, 0
        %p1309 = scmp.lt.s32.totalorder %s25, 1
        %p1310 = scmp.lt.s32.totalorder %s24, 1
        %p1311 = por %p1309, %p1310
        %p1312 = pnand %p1308, %p1311
        %p1313 = pneg %p1312
        // Predicated region
        $region87: #{tpu_custom_call.1} parent=77 // pred_check
          _
        $region88: #{tpu_custom_call.1} parent=77 // pred_check_branch
          %1315 = sbr.rel (%p1312) target = $region90
        $region89: #{tpu_custom_call.1} parent=77 // pred_region
          %v1316 = vld [vmem:[%s556] sm:$0xff]
          %v1317 = vld [vmem:[%s561] sm:$0xff]
          %v1318 = vld [vmem:[%s561 + $0x8] sm:$0xff]
          %v1319 = vld [vmem:[%s561 + $0x10] sm:$0xff]
          %v1320 = vld [vmem:[%s561 + $0x18] sm:$0xff]
          %v1321 = vld [vmem:[%s561 + $0x20] sm:$0xff]
          %v1322 = vld [vmem:[%s561 + $0x28] sm:$0xff]
          %v1323 = vld [vmem:[%s561 + $0x30] sm:$0xff]
          %v1324 = vld [vmem:[%s561 + $0x38] sm:$0xff]
          %v1325 = vld [vmem:[%s561 + $0x40] sm:$0xff]
          %v1326 = vld [vmem:[%s561 + $0x48] sm:$0xff]
          %v1327 = vld [vmem:[%s561 + $0x50] sm:$0xff]
          %v1328 = vld [vmem:[%s561 + $0x58] sm:$0xff]
          %v1329 = vld [vmem:[%s561 + $0x60] sm:$0xff]
          %v1330 = vld [vmem:[%s561 + $0x68] sm:$0xff]
          %v1331 = vld [vmem:[%s561 + $0x70] sm:$0xff]
          %v1332 = vld [vmem:[%s561 + $0x78] sm:$0xff]
          %v1333 = vld [vmem:[%s489] sm:$0xff]
          %v1334 = vld [vmem:[%s489 + $0x8] sm:$0xff]
          %v1335 = vld [vmem:[%s489 + $0x10] sm:$0xff]
          %v1336 = vld [vmem:[%s489 + $0x18] sm:$0xff]
          %v1337 = vld [vmem:[%s489 + $0x20] sm:$0xff]
          %v1338 = vld [vmem:[%s489 + $0x28] sm:$0xff]
          %v1339 = vld [vmem:[%s489 + $0x30] sm:$0xff]
          %v1340 = vld [vmem:[%s489 + $0x38] sm:$0xff]
          %v1341 = vld [vmem:[%s489 + $0x40] sm:$0xff]
          %v1342 = vld [vmem:[%s489 + $0x48] sm:$0xff]
          %v1343 = vld [vmem:[%s489 + $0x50] sm:$0xff]
          %v1344 = vld [vmem:[%s489 + $0x58] sm:$0xff]
          %v1345 = vld [vmem:[%s489 + $0x60] sm:$0xff]
          %v1346 = vld [vmem:[%s489 + $0x68] sm:$0xff]
          %v1347 = vld [vmem:[%s489 + $0x70] sm:$0xff]
          %v1348 = vld [vmem:[%s489 + $0x78] sm:$0xff]
          %1349 = vmatprep.subr.mxu0 0.0
          %1350 = vmatpush1.msra.mxu0 %v1348
          %1351 = vmatprep.subr.mxu0 0.0
          %1352 = vmatpush1.msra.mxu0 %v1347
          %1353 = vmatprep.subr.mxu0 0.0
          %1354 = vmatpush1.msra.mxu0 %v1346
          %1355 = vmatprep.subr.mxu0 0.0
          %1356 = vmatpush1.msra.mxu0 %v1345
          %1357 = vmatprep.subr.mxu0 0.0
          %1358 = vmatpush1.msra.mxu0 %v1344
          %1359 = vmatprep.subr.mxu0 0.0
          %1360 = vmatpush1.msra.mxu0 %v1343
          %1361 = vmatprep.subr.mxu0 0.0
          %1362 = vmatpush1.msra.mxu0 %v1342
          %1363 = vmatprep.subr.mxu0 0.0
          %1364 = vmatpush1.msra.mxu0 %v1341
          %1365 = vmatprep.subr.mxu0 0.0
          %1366 = vmatpush1.msra.mxu0 %v1340
          %1367 = vmatprep.subr.mxu0 0.0
          %1368 = vmatpush1.msra.mxu0 %v1339
          %1369 = vmatprep.subr.mxu0 0.0
          %1370 = vmatpush1.msra.mxu0 %v1338
          %1371 = vmatprep.subr.mxu0 0.0
          %1372 = vmatpush1.msra.mxu0 %v1337
          %1373 = vmatprep.subr.mxu0 0.0
          %1374 = vmatpush1.msra.mxu0 %v1336
          %1375 = vmatprep.subr.mxu0 0.0
          %1376 = vmatpush1.msra.mxu0 %v1335
          %1377 = vmatprep.subr.mxu0 0.0
          %1378 = vmatpush1.msra.mxu0 %v1334
          %1379 = vmatprep.subr.mxu0 0.0
          %1380 = vmatpush1.msra.mxu0 %v1333
          %1381 = vmatprep.subr.mxu0 0.0
          %1382 = vmatpush2.msra.mxu0 0.0
          %1383 = vmatprep.subr.mxu0 0.0
          %1384 = vmatpush2.msra.mxu0 0.0
          %1385 = vmatprep.subr.mxu0 0.0
          %1386 = vmatpush2.msra.mxu0 0.0
          %1387 = vmatprep.subr.mxu0 0.0
          %1388 = vmatpush2.msra.mxu0 0.0
          %1389 = vmatprep.subr.mxu0 0.0
          %1390 = vmatpush2.msra.mxu0 0.0
          %1391 = vmatprep.subr.mxu0 0.0
          %1392 = vmatpush2.msra.mxu0 0.0
          %1393 = vmatprep.subr.mxu0 0.0
          %1394 = vmatpush2.msra.mxu0 0.0
          %1395 = vmatprep.subr.mxu0 0.0
          %1396 = vmatpush2.msra.mxu0 0.0
          %1397 = vmatprep.subr.mxu0 0.0
          %1398 = vmatpush2.msra.mxu0 0.0
          %1399 = vmatprep.subr.mxu0 0.0
          %1400 = vmatpush2.msra.mxu0 0.0
          %1401 = vmatprep.subr.mxu0 0.0
          %1402 = vmatpush2.msra.mxu0 0.0
          %1403 = vmatprep.subr.mxu0 0.0
          %1404 = vmatpush2.msra.mxu0 0.0
          %1405 = vmatprep.subr.mxu0 0.0
          %1406 = vmatpush2.msra.mxu0 0.0
          %1407 = vmatprep.subr.mxu0 0.0
          %1408 = vmatpush2.msra.mxu0 0.0
          %1409 = vmatprep.subr.mxu0 0.0
          %1410 = vmatpush2.msra.mxu0 0.0
          %1411 = vmatprep.subr.mxu0 0.0
          %1412 = vmatpush2.msra.mxu0 0.0
          %1413 = vmatprep.mubr.f32.mxu0 0.0
          %1414 = vmatmul.mubr.f32.gmra.mxu0 %v1317
          %v1415 = vpop.f32.mrf.mxu0
          %v1416 = vadd.f32 0.0, %v1415
          %v1417 = vpop.f32.mrf.mxu0
          %1418 = vmatprep.mubr.f32.mxu0 0.0
          %1419 = vmatmul.mubr.f32.gmra.mxu0 %v1318
          %v1420 = vpop.f32.mrf.mxu0
          %v1421 = vadd.f32 0.0, %v1420
          %v1422 = vpop.f32.mrf.mxu0
          %1423 = vmatprep.mubr.f32.mxu0 0.0
          %1424 = vmatmul.mubr.f32.gmra.mxu0 %v1319
          %v1425 = vpop.f32.mrf.mxu0
          %v1426 = vadd.f32 0.0, %v1425
          %v1427 = vpop.f32.mrf.mxu0
          %1428 = vmatprep.mubr.f32.mxu0 0.0
          %1429 = vmatmul.mubr.f32.gmra.mxu0 %v1320
          %v1430 = vpop.f32.mrf.mxu0
          %v1431 = vadd.f32 0.0, %v1430
          %v1432 = vpop.f32.mrf.mxu0
          %1433 = vmatprep.mubr.f32.mxu0 0.0
          %1434 = vmatmul.mubr.f32.gmra.mxu0 %v1321
          %v1435 = vpop.f32.mrf.mxu0
          %v1436 = vadd.f32 0.0, %v1435
          %v1437 = vpop.f32.mrf.mxu0
          %1438 = vmatprep.mubr.f32.mxu0 0.0
          %1439 = vmatmul.mubr.f32.gmra.mxu0 %v1322
          %v1440 = vpop.f32.mrf.mxu0
          %v1441 = vadd.f32 0.0, %v1440
          %v1442 = vpop.f32.mrf.mxu0
          %1443 = vmatprep.mubr.f32.mxu0 0.0
          %1444 = vmatmul.mubr.f32.gmra.mxu0 %v1323
          %v1445 = vpop.f32.mrf.mxu0
          %v1446 = vadd.f32 0.0, %v1445
          %v1447 = vpop.f32.mrf.mxu0
          %1448 = vmatprep.mubr.f32.mxu0 0.0
          %1449 = vmatmul.mubr.f32.gmra.mxu0 %v1324
          %v1450 = vpop.f32.mrf.mxu0
          %v1451 = vadd.f32 0.0, %v1450
          %v1452 = vpop.f32.mrf.mxu0
          %1453 = vmatprep.mubr.f32.mxu0 0.0
          %1454 = vmatmul.mubr.f32.gmra.mxu0 %v1325
          %v1455 = vpop.f32.mrf.mxu0
          %v1456 = vadd.f32 0.0, %v1455
          %v1457 = vpop.f32.mrf.mxu0
          %1458 = vmatprep.mubr.f32.mxu0 0.0
          %1459 = vmatmul.mubr.f32.gmra.mxu0 %v1326
          %v1460 = vpop.f32.mrf.mxu0
          %v1461 = vadd.f32 0.0, %v1460
          %v1462 = vpop.f32.mrf.mxu0
          %1463 = vmatprep.mubr.f32.mxu0 0.0
          %1464 = vmatmul.mubr.f32.gmra.mxu0 %v1327
          %v1465 = vpop.f32.mrf.mxu0
          %v1466 = vadd.f32 0.0, %v1465
          %v1467 = vpop.f32.mrf.mxu0
          %1468 = vmatprep.mubr.f32.mxu0 0.0
          %1469 = vmatmul.mubr.f32.gmra.mxu0 %v1328
          %v1470 = vpop.f32.mrf.mxu0
          %v1471 = vadd.f32 0.0, %v1470
          %v1472 = vpop.f32.mrf.mxu0
          %1473 = vmatprep.mubr.f32.mxu0 0.0
          %1474 = vmatmul.mubr.f32.gmra.mxu0 %v1329
          %v1475 = vpop.f32.mrf.mxu0
          %v1476 = vadd.f32 0.0, %v1475
          %v1477 = vpop.f32.mrf.mxu0
          %1478 = vmatprep.mubr.f32.mxu0 0.0
          %1479 = vmatmul.mubr.f32.gmra.mxu0 %v1330
          %v1480 = vpop.f32.mrf.mxu0
          %v1481 = vadd.f32 0.0, %v1480
          %v1482 = vpop.f32.mrf.mxu0
          %1483 = vmatprep.mubr.f32.mxu0 0.0
          %1484 = vmatmul.mubr.f32.gmra.mxu0 %v1331
          %v1485 = vpop.f32.mrf.mxu0
          %v1486 = vadd.f32 0.0, %v1485
          %v1487 = vpop.f32.mrf.mxu0
          %1488 = vmatprep.mubr.f32.mxu0 0.0
          %1489 = vmatmul.mubr.f32.gmra.mxu0 %v1332
          %v1490 = vpop.f32.mrf.mxu0
          %v1491 = vadd.f32 0.0, %v1490
          %v1492 = vpop.f32.mrf.mxu0
          %1493 = vdwg.mxu0
          %v1494 = vld [vmem:[%s577] sm:$0xff]
          %v1495 = vld [vmem:[%s577 + $0x8] sm:$0xff]
          %v1496 = vld [vmem:[%s577 + $0x10] sm:$0xff]
          %v1497 = vld [vmem:[%s577 + $0x18] sm:$0xff]
          %v1498 = vld [vmem:[%s577 + $0x20] sm:$0xff]
          %v1499 = vld [vmem:[%s577 + $0x28] sm:$0xff]
          %v1500 = vld [vmem:[%s577 + $0x30] sm:$0xff]
          %v1501 = vld [vmem:[%s577 + $0x38] sm:$0xff]
          %v1502 = vld [vmem:[%s577 + $0x40] sm:$0xff]
          %v1503 = vld [vmem:[%s577 + $0x48] sm:$0xff]
          %v1504 = vld [vmem:[%s577 + $0x50] sm:$0xff]
          %v1505 = vld [vmem:[%s577 + $0x58] sm:$0xff]
          %v1506 = vld [vmem:[%s577 + $0x60] sm:$0xff]
          %v1507 = vld [vmem:[%s577 + $0x68] sm:$0xff]
          %v1508 = vld [vmem:[%s577 + $0x70] sm:$0xff]
          %v1509 = vld [vmem:[%s577 + $0x78] sm:$0xff]
          %v1510 = vld [vmem:[%s591] sm:$0x1]
          %1512 = vset.pattern.permute.xlu0 0
          %1513 = vperm.xlu0 %1512, %v1494
          %v1514 = vpop.permute.xlu0 %1513
          %1517 = vset.pattern.permute.xlu0 0
          %1518 = vperm.xlu0 %1517, %v1495
          %v1519 = vpop.permute.xlu0 %1518
          %1522 = vset.pattern.permute.xlu0 0
          %1523 = vperm.xlu0 %1522, %v1496
          %v1524 = vpop.permute.xlu0 %1523
          %1527 = vset.pattern.permute.xlu0 0
          %1528 = vperm.xlu0 %1527, %v1497
          %v1529 = vpop.permute.xlu0 %1528
          %1532 = vset.pattern.permute.xlu0 0
          %1533 = vperm.xlu0 %1532, %v1498
          %v1534 = vpop.permute.xlu0 %1533
          %1537 = vset.pattern.permute.xlu0 0
          %1538 = vperm.xlu0 %1537, %v1499
          %v1539 = vpop.permute.xlu0 %1538
          %1542 = vset.pattern.permute.xlu0 0
          %1543 = vperm.xlu0 %1542, %v1500
          %v1544 = vpop.permute.xlu0 %1543
          %1547 = vset.pattern.permute.xlu0 0
          %1548 = vperm.xlu0 %1547, %v1501
          %v1549 = vpop.permute.xlu0 %1548
          %1552 = vset.pattern.permute.xlu0 0
          %1553 = vperm.xlu0 %1552, %v1502
          %v1554 = vpop.permute.xlu0 %1553
          %1557 = vset.pattern.permute.xlu0 0
          %1558 = vperm.xlu0 %1557, %v1503
          %v1559 = vpop.permute.xlu0 %1558
          %1562 = vset.pattern.permute.xlu0 0
          %1563 = vperm.xlu0 %1562, %v1504
          %v1564 = vpop.permute.xlu0 %1563
          %1567 = vset.pattern.permute.xlu0 0
          %1568 = vperm.xlu0 %1567, %v1505
          %v1569 = vpop.permute.xlu0 %1568
          %1572 = vset.pattern.permute.xlu0 0
          %1573 = vperm.xlu0 %1572, %v1506
          %v1574 = vpop.permute.xlu0 %1573
          %1577 = vset.pattern.permute.xlu0 0
          %1578 = vperm.xlu0 %1577, %v1507
          %v1579 = vpop.permute.xlu0 %1578
          %1582 = vset.pattern.permute.xlu0 0
          %1583 = vperm.xlu0 %1582, %v1508
          %v1584 = vpop.permute.xlu0 %1583
          %1587 = vset.pattern.permute.xlu0 0
          %1588 = vperm.xlu0 %1587, %v1509
          %v1589 = vpop.permute.xlu0 %1588
          %v1592 = vlaneseq
          %v1593 = vshrl.u32 %v1592, 7
          %v1594 = vsub.s32 0, %v1593
          %v1595 = vrot.slane %v1510, %v1594
          %v1597 = vadd.f32 %v1514, %v1595
          %v1598 = vadd.f32 %v1519, %v1595
          %v1599 = vadd.f32 %v1524, %v1595
          %v1600 = vadd.f32 %v1529, %v1595
          %v1601 = vadd.f32 %v1534, %v1595
          %v1602 = vadd.f32 %v1539, %v1595
          %v1603 = vadd.f32 %v1544, %v1595
          %v1604 = vadd.f32 %v1549, %v1595
          %v1605 = vadd.f32 %v1554, %v1595
          %v1606 = vadd.f32 %v1559, %v1595
          %v1607 = vadd.f32 %v1564, %v1595
          %v1608 = vadd.f32 %v1569, %v1595
          %v1609 = vadd.f32 %v1574, %v1595
          %v1610 = vadd.f32 %v1579, %v1595
          %v1611 = vadd.f32 %v1584, %v1595
          %v1612 = vadd.f32 %v1589, %v1595
          %v1613 = vmul.f32 %v1416, 2.0
          %v1614 = vmul.f32 %v1421, 2.0
          %v1615 = vmul.f32 %v1426, 2.0
          %v1616 = vmul.f32 %v1431, 2.0
          %v1617 = vmul.f32 %v1436, 2.0
          %v1618 = vmul.f32 %v1441, 2.0
          %v1619 = vmul.f32 %v1446, 2.0
          %v1620 = vmul.f32 %v1451, 2.0
          %v1621 = vmul.f32 %v1456, 2.0
          %v1622 = vmul.f32 %v1461, 2.0
          %v1623 = vmul.f32 %v1466, 2.0
          %v1624 = vmul.f32 %v1471, 2.0
          %v1625 = vmul.f32 %v1476, 2.0
          %v1626 = vmul.f32 %v1481, 2.0
          %v1627 = vmul.f32 %v1486, 2.0
          %v1628 = vmul.f32 %v1491, 2.0
          %v1629 = vsub.f32 %v1597, %v1613
          %v1630 = vsub.f32 %v1598, %v1614
          %v1631 = vsub.f32 %v1599, %v1615
          %v1632 = vsub.f32 %v1600, %v1616
          %v1633 = vsub.f32 %v1601, %v1617
          %v1634 = vsub.f32 %v1602, %v1618
          %v1635 = vsub.f32 %v1603, %v1619
          %v1636 = vsub.f32 %v1604, %v1620
          %v1637 = vsub.f32 %v1605, %v1621
          %v1638 = vsub.f32 %v1606, %v1622
          %v1639 = vsub.f32 %v1607, %v1623
          %v1640 = vsub.f32 %v1608, %v1624
          %v1641 = vsub.f32 %v1609, %v1625
          %v1642 = vsub.f32 %v1610, %v1626
          %v1643 = vsub.f32 %v1611, %v1627
          %v1644 = vsub.f32 %v1612, %v1628
          %v1645 = vmax.f32 %v1629, 0.0
          %v1646 = vmax.f32 %v1630, 0.0
          %v1647 = vmax.f32 %v1631, 0.0
          %v1648 = vmax.f32 %v1632, 0.0
          %v1649 = vmax.f32 %v1633, 0.0
          %v1650 = vmax.f32 %v1634, 0.0
          %v1651 = vmax.f32 %v1635, 0.0
          %v1652 = vmax.f32 %v1636, 0.0
          %v1653 = vmax.f32 %v1637, 0.0
          %v1654 = vmax.f32 %v1638, 0.0
          %v1655 = vmax.f32 %v1639, 0.0
          %v1656 = vmax.f32 %v1640, 0.0
          %v1657 = vmax.f32 %v1641, 0.0
          %v1658 = vmax.f32 %v1642, 0.0
          %v1659 = vmax.f32 %v1643, 0.0
          %v1660 = vmax.f32 %v1644, 0.0
          %v1661 = vrsqrt.pop %v1645
          %v1662 = vmul.f32 %v1645, %v1661
          %vm1663 = vcmp.eq.f32.partialorder %v1645, inf
          %v1664 = vsel %vm1663, %v1645, %v1662
          %vm1665 = vcmp.eq.f32.partialorder %v1645, 0.0
          %v1666 = vand.u32 %v1645, 2147483648
          %v1667 = vsel %vm1665, %v1666, %v1664
          %v1668 = vrsqrt.pop %v1646
          %v1669 = vmul.f32 %v1646, %v1668
          %vm1670 = vcmp.eq.f32.partialorder %v1646, inf
          %v1671 = vsel %vm1670, %v1646, %v1669
          %vm1672 = vcmp.eq.f32.partialorder %v1646, 0.0
          %v1673 = vand.u32 %v1646, 2147483648
          %v1674 = vsel %vm1672, %v1673, %v1671
          %v1675 = vrsqrt.pop %v1647
          %v1676 = vmul.f32 %v1647, %v1675
          %vm1677 = vcmp.eq.f32.partialorder %v1647, inf
          %v1678 = vsel %vm1677, %v1647, %v1676
          %vm1679 = vcmp.eq.f32.partialorder %v1647, 0.0
          %v1680 = vand.u32 %v1647, 2147483648
          %v1681 = vsel %vm1679, %v1680, %v1678
          %v1682 = vrsqrt.pop %v1648
          %v1683 = vmul.f32 %v1648, %v1682
          %vm1684 = vcmp.eq.f32.partialorder %v1648, inf
          %v1685 = vsel %vm1684, %v1648, %v1683
          %vm1686 = vcmp.eq.f32.partialorder %v1648, 0.0
          %v1687 = vand.u32 %v1648, 2147483648
          %v1688 = vsel %vm1686, %v1687, %v1685
          %v1689 = vrsqrt.pop %v1649
          %v1690 = vmul.f32 %v1649, %v1689
          %vm1691 = vcmp.eq.f32.partialorder %v1649, inf
          %v1692 = vsel %vm1691, %v1649, %v1690
          %vm1693 = vcmp.eq.f32.partialorder %v1649, 0.0
          %v1694 = vand.u32 %v1649, 2147483648
          %v1695 = vsel %vm1693, %v1694, %v1692
          %v1696 = vrsqrt.pop %v1650
          %v1697 = vmul.f32 %v1650, %v1696
          %vm1698 = vcmp.eq.f32.partialorder %v1650, inf
          %v1699 = vsel %vm1698, %v1650, %v1697
          %vm1700 = vcmp.eq.f32.partialorder %v1650, 0.0
          %v1701 = vand.u32 %v1650, 2147483648
          %v1702 = vsel %vm1700, %v1701, %v1699
          %v1703 = vrsqrt.pop %v1651
          %v1704 = vmul.f32 %v1651, %v1703
          %vm1705 = vcmp.eq.f32.partialorder %v1651, inf
          %v1706 = vsel %vm1705, %v1651, %v1704
          %vm1707 = vcmp.eq.f32.partialorder %v1651, 0.0
          %v1708 = vand.u32 %v1651, 2147483648
          %v1709 = vsel %vm1707, %v1708, %v1706
          %v1710 = vrsqrt.pop %v1652
          %v1711 = vmul.f32 %v1652, %v1710
          %vm1712 = vcmp.eq.f32.partialorder %v1652, inf
          %v1713 = vsel %vm1712, %v1652, %v1711
          %vm1714 = vcmp.eq.f32.partialorder %v1652, 0.0
          %v1715 = vand.u32 %v1652, 2147483648
          %v1716 = vsel %vm1714, %v1715, %v1713
          %v1717 = vrsqrt.pop %v1653
          %v1718 = vmul.f32 %v1653, %v1717
          %vm1719 = vcmp.eq.f32.partialorder %v1653, inf
          %v1720 = vsel %vm1719, %v1653, %v1718
          %vm1721 = vcmp.eq.f32.partialorder %v1653, 0.0
          %v1722 = vand.u32 %v1653, 2147483648
          %v1723 = vsel %vm1721, %v1722, %v1720
          %v1724 = vrsqrt.pop %v1654
          %v1725 = vmul.f32 %v1654, %v1724
          %vm1726 = vcmp.eq.f32.partialorder %v1654, inf
          %v1727 = vsel %vm1726, %v1654, %v1725
          %vm1728 = vcmp.eq.f32.partialorder %v1654, 0.0
          %v1729 = vand.u32 %v1654, 2147483648
          %v1730 = vsel %vm1728, %v1729, %v1727
          %v1731 = vrsqrt.pop %v1655
          %v1732 = vmul.f32 %v1655, %v1731
          %vm1733 = vcmp.eq.f32.partialorder %v1655, inf
          %v1734 = vsel %vm1733, %v1655, %v1732
          %vm1735 = vcmp.eq.f32.partialorder %v1655, 0.0
          %v1736 = vand.u32 %v1655, 2147483648
          %v1737 = vsel %vm1735, %v1736, %v1734
          %v1738 = vrsqrt.pop %v1656
          %v1739 = vmul.f32 %v1656, %v1738
          %vm1740 = vcmp.eq.f32.partialorder %v1656, inf
          %v1741 = vsel %vm1740, %v1656, %v1739
          %vm1742 = vcmp.eq.f32.partialorder %v1656, 0.0
          %v1743 = vand.u32 %v1656, 2147483648
          %v1744 = vsel %vm1742, %v1743, %v1741
          %v1745 = vrsqrt.pop %v1657
          %v1746 = vmul.f32 %v1657, %v1745
          %vm1747 = vcmp.eq.f32.partialorder %v1657, inf
          %v1748 = vsel %vm1747, %v1657, %v1746
          %vm1749 = vcmp.eq.f32.partialorder %v1657, 0.0
          %v1750 = vand.u32 %v1657, 2147483648
          %v1751 = vsel %vm1749, %v1750, %v1748
          %v1752 = vrsqrt.pop %v1658
          %v1753 = vmul.f32 %v1658, %v1752
          %vm1754 = vcmp.eq.f32.partialorder %v1658, inf
          %v1755 = vsel %vm1754, %v1658, %v1753
          %vm1756 = vcmp.eq.f32.partialorder %v1658, 0.0
          %v1757 = vand.u32 %v1658, 2147483648
          %v1758 = vsel %vm1756, %v1757, %v1755
          %v1759 = vrsqrt.pop %v1659
          %v1760 = vmul.f32 %v1659, %v1759
          %vm1761 = vcmp.eq.f32.partialorder %v1659, inf
          %v1762 = vsel %vm1761, %v1659, %v1760
          %vm1763 = vcmp.eq.f32.partialorder %v1659, 0.0
          %v1764 = vand.u32 %v1659, 2147483648
          %v1765 = vsel %vm1763, %v1764, %v1762
          %v1766 = vrsqrt.pop %v1660
          %v1767 = vmul.f32 %v1660, %v1766
          %vm1768 = vcmp.eq.f32.partialorder %v1660, inf
          %v1769 = vsel %vm1768, %v1660, %v1767
          %vm1770 = vcmp.eq.f32.partialorder %v1660, 0.0
          %v1771 = vand.u32 %v1660, 2147483648
          %v1772 = vsel %vm1770, %v1771, %v1769
          %v1773 = vsub.f32 1.0, %v1667
          %v1774 = vsub.f32 1.0, %v1674
          %v1775 = vsub.f32 1.0, %v1681
          %v1776 = vsub.f32 1.0, %v1688
          %v1777 = vsub.f32 1.0, %v1695
          %v1778 = vsub.f32 1.0, %v1702
          %v1779 = vsub.f32 1.0, %v1709
          %v1780 = vsub.f32 1.0, %v1716
          %v1781 = vsub.f32 1.0, %v1723
          %v1782 = vsub.f32 1.0, %v1730
          %v1783 = vsub.f32 1.0, %v1737
          %v1784 = vsub.f32 1.0, %v1744
          %v1785 = vsub.f32 1.0, %v1751
          %v1786 = vsub.f32 1.0, %v1758
          %v1787 = vsub.f32 1.0, %v1765
          %v1788 = vsub.f32 1.0, %v1772
          %v1789 = vmax.f32 %v1773, 0.0
          %v1790 = vmax.f32 %v1774, 0.0
          %v1791 = vmax.f32 %v1775, 0.0
          %v1792 = vmax.f32 %v1776, 0.0
          %v1793 = vmax.f32 %v1777, 0.0
          %v1794 = vmax.f32 %v1778, 0.0
          %v1795 = vmax.f32 %v1779, 0.0
          %v1796 = vmax.f32 %v1780, 0.0
          %v1797 = vmax.f32 %v1781, 0.0
          %v1798 = vmax.f32 %v1782, 0.0
          %v1799 = vmax.f32 %v1783, 0.0
          %v1800 = vmax.f32 %v1784, 0.0
          %v1801 = vmax.f32 %v1785, 0.0
          %v1802 = vmax.f32 %v1786, 0.0
          %v1803 = vmax.f32 %v1787, 0.0
          %v1804 = vmax.f32 %v1788, 0.0
          %v1805 = vld [vmem:[%s606] sm:$0xff]
          %v1806 = vld [vmem:[%s606 + $0x8] sm:$0xff]
          %v1807 = vld [vmem:[%s606 + $0x10] sm:$0xff]
          %v1808 = vld [vmem:[%s606 + $0x18] sm:$0xff]
          %v1809 = vld [vmem:[%s606 + $0x20] sm:$0xff]
          %v1810 = vld [vmem:[%s606 + $0x28] sm:$0xff]
          %v1811 = vld [vmem:[%s606 + $0x30] sm:$0xff]
          %v1812 = vld [vmem:[%s606 + $0x38] sm:$0xff]
          %v1813 = vld [vmem:[%s606 + $0x40] sm:$0xff]
          %v1814 = vld [vmem:[%s606 + $0x48] sm:$0xff]
          %v1815 = vld [vmem:[%s606 + $0x50] sm:$0xff]
          %v1816 = vld [vmem:[%s606 + $0x58] sm:$0xff]
          %v1817 = vld [vmem:[%s606 + $0x60] sm:$0xff]
          %v1818 = vld [vmem:[%s606 + $0x68] sm:$0xff]
          %v1819 = vld [vmem:[%s606 + $0x70] sm:$0xff]
          %v1820 = vld [vmem:[%s606 + $0x78] sm:$0xff]
          %v1821 = vld [vmem:[%s620] sm:$0x1]
          %1822 = vset.pattern.permute.xlu0 0
          %1823 = vperm.xlu0 %1822, %v1805
          %v1824 = vpop.permute.xlu0 %1823
          %1825 = vset.pattern.permute.xlu0 0
          %1826 = vperm.xlu0 %1825, %v1806
          %v1827 = vpop.permute.xlu0 %1826
          %1828 = vset.pattern.permute.xlu0 0
          %1829 = vperm.xlu0 %1828, %v1807
          %v1830 = vpop.permute.xlu0 %1829
          %1831 = vset.pattern.permute.xlu0 0
          %1832 = vperm.xlu0 %1831, %v1808
          %v1833 = vpop.permute.xlu0 %1832
          %1834 = vset.pattern.permute.xlu0 0
          %1835 = vperm.xlu0 %1834, %v1809
          %v1836 = vpop.permute.xlu0 %1835
          %1837 = vset.pattern.permute.xlu0 0
          %1838 = vperm.xlu0 %1837, %v1810
          %v1839 = vpop.permute.xlu0 %1838
          %1840 = vset.pattern.permute.xlu0 0
          %1841 = vperm.xlu0 %1840, %v1811
          %v1842 = vpop.permute.xlu0 %1841
          %1843 = vset.pattern.permute.xlu0 0
          %1844 = vperm.xlu0 %1843, %v1812
          %v1845 = vpop.permute.xlu0 %1844
          %1846 = vset.pattern.permute.xlu0 0
          %1847 = vperm.xlu0 %1846, %v1813
          %v1848 = vpop.permute.xlu0 %1847
          %1849 = vset.pattern.permute.xlu0 0
          %1850 = vperm.xlu0 %1849, %v1814
          %v1851 = vpop.permute.xlu0 %1850
          %1852 = vset.pattern.permute.xlu0 0
          %1853 = vperm.xlu0 %1852, %v1815
          %v1854 = vpop.permute.xlu0 %1853
          %1855 = vset.pattern.permute.xlu0 0
          %1856 = vperm.xlu0 %1855, %v1816
          %v1857 = vpop.permute.xlu0 %1856
          %1858 = vset.pattern.permute.xlu0 0
          %1859 = vperm.xlu0 %1858, %v1817
          %v1860 = vpop.permute.xlu0 %1859
          %1861 = vset.pattern.permute.xlu0 0
          %1862 = vperm.xlu0 %1861, %v1818
          %v1863 = vpop.permute.xlu0 %1862
          %1864 = vset.pattern.permute.xlu0 0
          %1865 = vperm.xlu0 %1864, %v1819
          %v1866 = vpop.permute.xlu0 %1865
          %1867 = vset.pattern.permute.xlu0 0
          %1868 = vperm.xlu0 %1867, %v1820
          %v1869 = vpop.permute.xlu0 %1868
          %v1870 = vlaneseq
          %v1871 = vshrl.u32 %v1870, 7
          %v1872 = vsub.s32 0, %v1871
          %v1873 = vrot.slane %v1821, %v1872
          %vm1874 = vcmp.eq.s32.totalorder %v1824, %v1873
          %vm1875 = vcmp.eq.s32.totalorder %v1827, %v1873
          %vm1876 = vcmp.eq.s32.totalorder %v1830, %v1873
          %vm1877 = vcmp.eq.s32.totalorder %v1833, %v1873
          %vm1878 = vcmp.eq.s32.totalorder %v1836, %v1873
          %vm1879 = vcmp.eq.s32.totalorder %v1839, %v1873
          %vm1880 = vcmp.eq.s32.totalorder %v1842, %v1873
          %vm1881 = vcmp.eq.s32.totalorder %v1845, %v1873
          %vm1882 = vcmp.eq.s32.totalorder %v1848, %v1873
          %vm1883 = vcmp.eq.s32.totalorder %v1851, %v1873
          %vm1884 = vcmp.eq.s32.totalorder %v1854, %v1873
          %vm1885 = vcmp.eq.s32.totalorder %v1857, %v1873
          %vm1886 = vcmp.eq.s32.totalorder %v1860, %v1873
          %vm1887 = vcmp.eq.s32.totalorder %v1863, %v1873
          %vm1888 = vcmp.eq.s32.totalorder %v1866, %v1873
          %vm1889 = vcmp.eq.s32.totalorder %v1869, %v1873
          %v1890 = vmul.f32 %v1789, %v1789
          %v1891 = vmul.f32 %v1790, %v1790
          %v1892 = vmul.f32 %v1791, %v1791
          %v1893 = vmul.f32 %v1792, %v1792
          %v1894 = vmul.f32 %v1793, %v1793
          %v1895 = vmul.f32 %v1794, %v1794
          %v1896 = vmul.f32 %v1795, %v1795
          %v1897 = vmul.f32 %v1796, %v1796
          %v1898 = vmul.f32 %v1797, %v1797
          %v1899 = vmul.f32 %v1798, %v1798
          %v1900 = vmul.f32 %v1799, %v1799
          %v1901 = vmul.f32 %v1800, %v1800
          %v1902 = vmul.f32 %v1801, %v1801
          %v1903 = vmul.f32 %v1802, %v1802
          %v1904 = vmul.f32 %v1803, %v1803
          %v1905 = vmul.f32 %v1804, %v1804
          %v1906 = vsel %vm1874, %v1645, %v1890
          %v1907 = vsel %vm1875, %v1646, %v1891
          %v1908 = vsel %vm1876, %v1647, %v1892
          %v1909 = vsel %vm1877, %v1648, %v1893
          %v1910 = vsel %vm1878, %v1649, %v1894
          %v1911 = vsel %vm1879, %v1650, %v1895
          %v1912 = vsel %vm1880, %v1651, %v1896
          %v1913 = vsel %vm1881, %v1652, %v1897
          %v1914 = vsel %vm1882, %v1653, %v1898
          %v1915 = vsel %vm1883, %v1654, %v1899
          %v1916 = vsel %vm1884, %v1655, %v1900
          %v1917 = vsel %vm1885, %v1656, %v1901
          %v1918 = vsel %vm1886, %v1657, %v1902
          %v1919 = vsel %vm1887, %v1658, %v1903
          %v1920 = vsel %vm1888, %v1659, %v1904
          %v1921 = vsel %vm1889, %v1660, %v1905
          %v1922 = vadd.f32 %v1906, %v1907
          %v1923 = vadd.f32 %v1922, %v1908
          %v1924 = vadd.f32 %v1923, %v1909
          %v1925 = vadd.f32 %v1924, %v1910
          %v1926 = vadd.f32 %v1925, %v1911
          %v1927 = vadd.f32 %v1926, %v1912
          %v1928 = vadd.f32 %v1927, %v1913
          %v1929 = vadd.f32 %v1928, %v1914
          %v1930 = vadd.f32 %v1929, %v1915
          %v1931 = vadd.f32 %v1930, %v1916
          %v1932 = vadd.f32 %v1931, %v1917
          %v1933 = vadd.f32 %v1932, %v1918
          %v1934 = vadd.f32 %v1933, %v1919
          %v1935 = vadd.f32 %v1934, %v1920
          %v1936 = vadd.f32 %v1935, %v1921
          %v1937 = vadd.f32 %v1316, %v1936
          %1938 = vst [vmem:[%s556] sm:$0xff] %v1937
        $region90: #{tpu_custom_call.1} parent=77 // pred_fallthru
          _
        %s1939 = sand.u32 %s256, 1
        %s1940 = scalar_lea.sflag [#allocation4], %s1939
        %s1941 = sand.u32 %s256, 1
        %s1942 = smul.addr %s1941, 8
        %s1943 = scalar_lea.vmem [#allocation3], %s1942
        // Predicated region
        $region91: #{tpu_custom_call.1} parent=77 // pred_check
          %p1944 = pneg %p266
        $region92: #{tpu_custom_call.1} parent=77 // pred_check_branch
          %1946 = sbr.rel (%p1944) target = $region94
        $region93: #{tpu_custom_call.1} parent=77 // pred_region
          %s1948 = ssub.s32 128, 128
          %1949 = vsyncadd %s1940, %s1948
          %s1950 = smul.addr %s24, 128
          %s1951 = scalar_lea.hbm %s6, %s1950
          %s1953 = sshll.u32 %s1943, 4
          %s1954 = int_to_ptr.vmem [resolvable:$true] %s1953
          %1956 = dma.vmem_to_hbm [thread:$0]  %s1954, 128, %s1951, %s1940
        $region94: #{tpu_custom_call.1} parent=77 // pred_fallthru
          _
      $region78: #{tpu_custom_call.1} parent=5 // pred_fallthru
        _
      %p1957 = scmp.le.s32.totalorder 2, %s15
      // Predicated region
      $region95: #{tpu_custom_call.1} parent=5 // pred_check
        %p1958 = pneg %p1957
      $region96: #{tpu_custom_call.1} parent=5 // pred_check_branch
        %1960 = sbr.rel (%p1958) target = $region98
      $region97: #{tpu_custom_call.1} parent=5 // pred_region
        %s1961 = ssub.s32 %s15, 2
        // Predicated region
        $region99: #{tpu_custom_call.1} parent=97 // pred_check
          %p1962 = pneg %p272
        $region100: #{tpu_custom_call.1} parent=97 // pred_check_branch
          %1964 = sbr.rel (%p1962) target = $region102
        $region101: #{tpu_custom_call.1} parent=97 // pred_region
          %s1965 = sand.u32 %s257, 1
          %s1966 = scalar_lea.sflag [#allocation4], %s1965
          %s1967 = sand.u32 %s257, 1
          %s1968 = smul.addr %s1967, 8
          %s1969 = scalar_lea.vmem [#allocation3], %s1968
          %1970 = dma.done %s1966, 128
        $region102: #{tpu_custom_call.1} parent=97 // pred_fallthru
          _
      $region98: #{tpu_custom_call.1} parent=5 // pred_fallthru
        _
    $region6: #{tpu_custom_call.1} parent=1 // loop_footer
      %s19 = sadd.s32 1, %s15
    $region7: #{tpu_custom_call.1} parent=1 // loop_footer_branch
      %14 = sbr.rel target = $region3
    $region8: #{tpu_custom_call.1} parent=1 // loop_exit
      _
    %1971 = vsyncpa [#allocation4], 1
    %s1972 = scalar_lea.sflag [#allocation4], 1
    %1973 = vsyncpa %s1972, 1

</llo_original>
